<compile_context>
chip_gen: v7x
topology: tpu7x:2x2x1
jax: 0.10.0
libtpu: 0.0.40
codegen_flags: <defaults>
</compile_context>

<pallas_src>
import jax
import jax.numpy as jnp
from jax.experimental import pallas as pl
from jax.experimental.pallas import tpu as pltpu

H1, H2, H3 = 128, 256, 128
LEAKY_SLOPE = 0.01          # nn.LeakyReLU default negative_slope
E_PAD = 128                 # lane-dense expert dimension inside the kernel
NEG_BIG = -1e30             # finite filler for padded expert logits (no inf-inf/NaN)


def _leaky_relu(x):
    # max(h, slope*h) == LeakyReLU for 0 < slope < 1; 2 VALU ops vs 3 for where().
    return jnp.maximum(x, LEAKY_SLOPE * x)


def gating_kernel(x_ref,
                  w1_ref, b1_ref,
                  w2_ref, b2_ref,
                  w3_ref, b3_ref,
                  w4_ref, b4_ref,
                  out_ref):
    # x arrives f32; cast to bf16 in-kernel for the MXU (no wrapper-side pass).
    x = x_ref[...].astype(jnp.bfloat16)

    # Biases: load once as f32 values (hoisted; no re-broadcast per op).
    b1 = b1_ref[...]
    b2 = b2_ref[...]
    b3 = b3_ref[...]
    b4 = b4_ref[...]

    # layer1 + ReLU  (dropout1 = identity in eval mode)
    h = jnp.dot(x, w1_ref[...], preferred_element_type=jnp.float32) + b1
    h = jnp.maximum(h, 0.0)

    # layer2 + LeakyReLU  (dropout2 = identity)
    h = jnp.dot(h.astype(jnp.bfloat16), w2_ref[...],
                preferred_element_type=jnp.float32) + b2
    h = _leaky_relu(h)

    # layer3 + LeakyReLU  (dropout3 = identity)
    h = jnp.dot(h.astype(jnp.bfloat16), w3_ref[...],
                preferred_element_type=jnp.float32) + b3
    h = _leaky_relu(h)

    # layer4 + softmax over experts (dim=1 == last axis for 2-D input).
    # Expert dim is padded to 128 lanes: padded logits are ~-1e30, so
    # exp(logit - max) underflows to exactly 0 and the softmax over the real
    # experts is unchanged, while the store is a full unmasked vst.
    logits = jnp.dot(h.astype(jnp.bfloat16), w4_ref[...],
                     preferred_element_type=jnp.float32) + b4
    m = jnp.max(logits, axis=-1, keepdims=True)
    e = jnp.exp(logits - m)
    denom = jnp.sum(e, axis=-1, keepdims=True)
    # approx reciprocal -> EUP slot (VALU stays free); fine for routing probs.
    out_ref[...] = (e * pl.reciprocal(denom, approx=True)).astype(out_ref.dtype)


def _round_up(n, m):
    return (n + m - 1) // m * m


def _num_tensorcores():
    """Best-effort TensorCores-per-chip query: v7x = 2, v5e/v6e = 1."""
    try:
        kind = str(getattr(jax.devices()[0], "device_kind", "")).lower()
        if "v7" in kind or "7x" in kind:
            return 2
    except Exception:
        pass
    return 1


def _choose_tiling(batch, max_tile_batch, num_cores):
    """Pick (padded_batch, tile_batch).

    Single-TC chips (v5e/v6e): one grid step for B <= max_tile_batch (the grid
    is a sequential loop there, so extra steps only add ~600-cycle overhead).
    Dual-TC (v7x): at least 2 "parallel" grid steps whenever the padded batch
    has >= 2 sublane tiles so both TensorCores get work.
    """
    bp = _round_up(batch, 8)                       # sublane granularity
    if bp <= max_tile_batch:
        if num_cores >= 2 and bp >= 16:
            bp = _round_up(bp, 16)
            return bp, bp // 2                     # two parallel tiles
        return bp, bp                              # single grid step
    bp = _round_up(bp, max_tile_batch)
    return bp, max_tile_batch


def _vmem_limit_bytes(tile_batch, d):
    """Explicit scoped-VMEM budget: ~2x computed need, capped at 32 MiB so we
    never crowd compiler scratch (v7x physical VMEM is 64 MiB per TC)."""
    bf16, f32 = 2, 4
    weights = (d * H1 + H1 * H2 + H2 * H3 + H3 * E_PAD) * bf16 * 2   # double-buffered
    biases = (H1 + H2 + H3 + E_PAD) * f32 * 2
    x_tile = tile_batch * d * f32 * 2                                # double-buffered
    out_tile = tile_batch * E_PAD * f32 * 2
    acts = tile_batch * (H1 + H2 + H3 + E_PAD) * (f32 + bf16)        # f32 + bf16 copies
    need = weights + biases + x_tile + out_tile + acts
    return int(min(32 * 1024 * 1024, max(8 * 1024 * 1024, 2 * need)))


def gating_forward(x, params, *, max_tile_batch=1024):
    """x: (B, input_dim) float32. params: f32 weights stored (in, out) + biases (1, out)."""
    B, D = x.shape
    E = params["w4"].shape[1]
    assert E <= E_PAD, "num_experts > 128 not supported by this kernel"

    num_cores = _num_tensorcores()
    Bp, tile_batch = _choose_tiling(B, max_tile_batch, num_cores)
    if Bp != B:
        x = jnp.pad(x, ((0, Bp - B), (0, 0)))

    # Weights -> bf16 host-side (tiny); x stays f32 (cast in-kernel).
    w1 = params["w1"].astype(jnp.bfloat16)
    w2 = params["w2"].astype(jnp.bfloat16)
    w3 = params["w3"].astype(jnp.bfloat16)
    # Lane-dense output prep: zero-pad w4 columns, pad b4 with a large
    # negative finite value so padded logits underflow to exp()=0.
    w4 = jnp.pad(params["w4"], ((0, 0), (0, E_PAD - E))).astype(jnp.bfloat16)
    b4 = jnp.pad(params["b4"], ((0, 0), (0, E_PAD - E)), constant_values=NEG_BIG)
    b1, b2, b3 = params["b1"], params["b2"], params["b3"]

    grid = (Bp // tile_batch,)

    def full_spec(shape):
        # Constant index_map -> Pallas DMAs this block once (first step) and
        # reuses the buffer; a few hundred KB at these layer widths.
        # TODO(synk): for very large input_dim, single-buffer the weight blocks
        # (pipeline_mode=pl.Buffered(1)) to halve their resident VMEM.
        return pl.BlockSpec(shape, lambda i: (0,) * len(shape))

    flops = 2 * Bp * (D * H1 + H1 * H2 + H2 * H3 + H3 * E_PAD)
    transcendentals = Bp * (E_PAD + 1)             # exp + reciprocal per row
    bytes_accessed = (x.size * 4 + Bp * E_PAD * 4
                      + (w1.size + w2.size + w3.size + w4.size) * 2
                      + (b1.size + b2.size + b3.size + b4.size) * 4)

    out = pl.pallas_call(
        gating_kernel,
        out_shape=jax.ShapeDtypeStruct((Bp, E_PAD), jnp.float32),
        grid_spec=pltpu.PrefetchScalarGridSpec(
            num_scalar_prefetch=0,
            grid=grid,
            in_specs=[
                pl.BlockSpec((tile_batch, D), lambda i: (i, 0)),   # x tile (f32)
                full_spec(w1.shape), full_spec(b1.shape),
                full_spec(w2.shape), full_spec(b2.shape),
                full_spec(w3.shape), full_spec(b3.shape),
                full_spec(w4.shape), full_spec(b4.shape),
            ],
            out_specs=pl.BlockSpec((tile_batch, E_PAD), lambda i: (i, 0)),
        ),
        compiler_params=pltpu.CompilerParams(
            dimension_semantics=("parallel",),
            vmem_limit_bytes=_vmem_limit_bytes(tile_batch, D)),
        cost_estimate=pl.CostEstimate(
            flops=int(flops),
            transcendentals=int(transcendentals),
            bytes_accessed=int(bytes_accessed)),
    )(x, w1, b1, w2, b2, w3, b3, w4, b4)

    return out[:B, :E]


def init_params(key, input_dim, num_experts):
    """Deterministic synthetic init (PyTorch-like uniform fan-in scaling)."""
    def linear(k, fan_in, fan_out):
        kw, kb = jax.random.split(k)
        bound = 1.0 / jnp.sqrt(fan_in)
        w = jax.random.uniform(kw, (fan_in, fan_out), jnp.float32, -bound, bound)
        b = jax.random.uniform(kb, (1, fan_out), jnp.float32, -bound, bound)
        return w, b

    k1, k2, k3, k4 = jax.random.split(key, 4)
    w1, b1 = linear(k1, input_dim, H1)
    w2, b2 = linear(k2, H1, H2)
    w3, b3 = linear(k3, H2, H3)
    w4, b4 = linear(k4, H3, num_experts)
    return dict(w1=w1, b1=b1, w2=w2, b2=b2, w3=w3, b3=b3, w4=w4, b4=b4)


def gating_reference_f32(x, p):
    """Pure-f32 JAX reference (matches the PyTorch module in eval mode)."""
    h = jnp.maximum(x @ p["w1"] + p["b1"], 0.0)
    h = _leaky_relu(h @ p["w2"] + p["b2"])
    h = _leaky_relu(h @ p["w3"] + p["b3"])
    logits = h @ p["w4"] + p["b4"]
    return jax.nn.softmax(logits, axis=1)


def gating_reference_mixed(x, p):
    """Reference using the kernel's mixed precision (bf16 MXU inputs, f32 accum)."""
    def mm(a, w):
        return jnp.dot(a.astype(jnp.bfloat16), w.astype(jnp.bfloat16),
                       preferred_element_type=jnp.float32)
    h = jnp.maximum(mm(x, p["w1"]) + p["b1"], 0.0)
    h = _leaky_relu(mm(h, p["w2"]) + p["b2"])
    h = _leaky_relu(mm(h, p["w3"]) + p["b3"])
    logits = mm(h, p["w4"]) + p["b4"]
    return jax.nn.softmax(logits, axis=1)


if __name__ == "__main__":
    key = jax.random.PRNGKey(0)
    kx, kp = jax.random.split(key)

    batch, input_dim, num_experts = 512, 64, 8
    x = jax.random.normal(kx, (batch, input_dim), jnp.float32)
    params = init_params(kp, input_dim, num_experts)

    out = jax.block_until_ready(gating_forward(x, params))

    assert out.shape == (batch, num_experts)
    # probabilities sum to ~1 along dim=1 (approx reciprocal -> loose tolerance)
    assert jnp.allclose(jnp.sum(out, axis=1), 1.0, atol=5e-3)
    # tight check against a reference using the same mixed precision
    ref_mixed = gating_reference_mixed(x, params)
    assert jnp.allclose(out, ref_mixed, atol=2e-3, rtol=2e-3)
    # loose check against the pure-f32 reference (bf16 MXU inputs)
    ref_f32 = gating_reference_f32(x, params)
    assert jnp.allclose(out, ref_f32, atol=3e-2, rtol=3e-2)

    # TODO(synk): dropout layers are identity (inference mode); training-mode
    # dropout would need pltpu.prng_seed/prng_random_bits masks in-kernel.
    print("KERNEL_OK")
</pallas_src>

<mosaic_0001>
module attributes {stable_mosaic.version = 11 : i64} {
  func.func @gating_kernel(%arg0: i32, %arg1: memref<512x64xf32, #tpu.memory_space<vmem>>, %arg2: memref<64x128xbf16, #tpu.memory_space<vmem>>, %arg3: memref<1x128xf32, #tpu.memory_space<vmem>>, %arg4: memref<128x256xbf16, #tpu.memory_space<vmem>>, %arg5: memref<1x256xf32, #tpu.memory_space<vmem>>, %arg6: memref<256x128xbf16, #tpu.memory_space<vmem>>, %arg7: memref<1x128xf32, #tpu.memory_space<vmem>>, %arg8: memref<128x128xbf16, #tpu.memory_space<vmem>>, %arg9: memref<1x128xf32, #tpu.memory_space<vmem>>, %arg10: memref<512x128xf32, #tpu.memory_space<vmem>>) attributes {dimension_semantics = [#tpu.dimension_semantics<parallel>], iteration_bounds = array<i64: 1>, scalar_prefetch = 0 : i64, scratch_operands = 0 : i64, tpu.core_type = #tpu.core_type<tc>, window_params = [{transform_indices = @transform_0, window_bounds = array<i64: 512, 64>}, {pipeline_mode = #tpu.pipeline_mode<synchronous>, transform_indices = @transform_1, window_bounds = array<i64: 64, 128>}, {pipeline_mode = #tpu.pipeline_mode<synchronous>, transform_indices = @transform_2, window_bounds = array<i64: 1, 128>}, {pipeline_mode = #tpu.pipeline_mode<synchronous>, transform_indices = @transform_3, window_bounds = array<i64: 128, 256>}, {pipeline_mode = #tpu.pipeline_mode<synchronous>, transform_indices = @transform_4, window_bounds = array<i64: 1, 256>}, {pipeline_mode = #tpu.pipeline_mode<synchronous>, transform_indices = @transform_5, window_bounds = array<i64: 256, 128>}, {pipeline_mode = #tpu.pipeline_mode<synchronous>, transform_indices = @transform_6, window_bounds = array<i64: 1, 128>}, {pipeline_mode = #tpu.pipeline_mode<synchronous>, transform_indices = @transform_7, window_bounds = array<i64: 128, 128>}, {pipeline_mode = #tpu.pipeline_mode<synchronous>, transform_indices = @transform_8, window_bounds = array<i64: 1, 128>}, {transform_indices = @transform_9, window_bounds = array<i64: 512, 128>}]} {
    %c0 = arith.constant 0 : index
    %c0_0 = arith.constant 0 : index
    %0 = vector.load %arg1[%c0, %c0_0] : memref<512x64xf32, #tpu.memory_space<vmem>>, vector<512x64xf32>
    %1 = arith.truncf %0 : vector<512x64xf32> to vector<512x64xbf16>
    %c0_1 = arith.constant 0 : index
    %c0_2 = arith.constant 0 : index
    %2 = vector.load %arg3[%c0_1, %c0_2] : memref<1x128xf32, #tpu.memory_space<vmem>>, vector<1x128xf32>
    %c0_3 = arith.constant 0 : index
    %c0_4 = arith.constant 0 : index
    %3 = vector.load %arg5[%c0_3, %c0_4] : memref<1x256xf32, #tpu.memory_space<vmem>>, vector<1x256xf32>
    %c0_5 = arith.constant 0 : index
    %c0_6 = arith.constant 0 : index
    %4 = vector.load %arg7[%c0_5, %c0_6] : memref<1x128xf32, #tpu.memory_space<vmem>>, vector<1x128xf32>
    %c0_7 = arith.constant 0 : index
    %c0_8 = arith.constant 0 : index
    %5 = vector.load %arg9[%c0_7, %c0_8] : memref<1x128xf32, #tpu.memory_space<vmem>>, vector<1x128xf32>
    %c0_9 = arith.constant 0 : index
    %c0_10 = arith.constant 0 : index
    %6 = vector.load %arg2[%c0_9, %c0_10] : memref<64x128xbf16, #tpu.memory_space<vmem>>, vector<64x128xbf16>
    %cst = arith.constant dense<0.000000e+00> : vector<512x128xf32>
    %7 = tpu.matmul %1, %6, %cst {dimension_numbers = #tpu.dot_dimension_numbers<[1], [0], [0], [1], [0, 0, 1, 1], [], []>} : vector<512x64xbf16>, vector<64x128xbf16>, vector<512x128xf32> -> vector<512x128xf32>
    %8 = vector.broadcast %2 : vector<1x128xf32> to vector<512x128xf32>
    %9 = arith.addf %7, %8 : vector<512x128xf32>
    %cst_11 = arith.constant 0.000000e+00 : f32
    %10 = vector.broadcast %cst_11 : f32 to vector<512x128xf32>
    %11 = arith.maximumf %9, %10 : vector<512x128xf32>
    %12 = arith.truncf %11 : vector<512x128xf32> to vector<512x128xbf16>
    %c0_12 = arith.constant 0 : index
    %c0_13 = arith.constant 0 : index
    %13 = vector.load %arg4[%c0_12, %c0_13] : memref<128x256xbf16, #tpu.memory_space<vmem>>, vector<128x256xbf16>
    %cst_14 = arith.constant dense<0.000000e+00> : vector<512x256xf32>
    %14 = tpu.matmul %12, %13, %cst_14 {dimension_numbers = #tpu.dot_dimension_numbers<[1], [0], [0], [1], [0, 0, 1, 1], [], []>} : vector<512x128xbf16>, vector<128x256xbf16>, vector<512x256xf32> -> vector<512x256xf32>
    %15 = vector.broadcast %3 : vector<1x256xf32> to vector<512x256xf32>
    %16 = arith.addf %14, %15 : vector<512x256xf32>
    %cst_15 = arith.constant 0.00999999977 : f32
    %17 = vector.broadcast %cst_15 : f32 to vector<512x256xf32>
    %18 = arith.mulf %17, %16 : vector<512x256xf32>
    %19 = arith.maximumf %16, %18 : vector<512x256xf32>
    %20 = arith.truncf %19 : vector<512x256xf32> to vector<512x256xbf16>
    %c0_16 = arith.constant 0 : index
    %c0_17 = arith.constant 0 : index
    %21 = vector.load %arg6[%c0_16, %c0_17] : memref<256x128xbf16, #tpu.memory_space<vmem>>, vector<256x128xbf16>
    %cst_18 = arith.constant dense<0.000000e+00> : vector<512x128xf32>
    %22 = tpu.matmul %20, %21, %cst_18 {dimension_numbers = #tpu.dot_dimension_numbers<[1], [0], [0], [1], [0, 0, 1, 1], [], []>} : vector<512x256xbf16>, vector<256x128xbf16>, vector<512x128xf32> -> vector<512x128xf32>
    %23 = vector.broadcast %4 : vector<1x128xf32> to vector<512x128xf32>
    %24 = arith.addf %22, %23 : vector<512x128xf32>
    %cst_19 = arith.constant 0.00999999977 : f32
    %25 = vector.broadcast %cst_19 : f32 to vector<512x128xf32>
    %26 = arith.mulf %25, %24 : vector<512x128xf32>
    %27 = arith.maximumf %24, %26 : vector<512x128xf32>
    %28 = arith.truncf %27 : vector<512x128xf32> to vector<512x128xbf16>
    %c0_20 = arith.constant 0 : index
    %c0_21 = arith.constant 0 : index
    %29 = vector.load %arg8[%c0_20, %c0_21] : memref<128x128xbf16, #tpu.memory_space<vmem>>, vector<128x128xbf16>
    %cst_22 = arith.constant dense<0.000000e+00> : vector<512x128xf32>
    %30 = tpu.matmul %28, %29, %cst_22 {dimension_numbers = #tpu.dot_dimension_numbers<[1], [0], [0], [1], [0, 0, 1, 1], [], []>} : vector<512x128xbf16>, vector<128x128xbf16>, vector<512x128xf32> -> vector<512x128xf32>
    %31 = vector.broadcast %5 : vector<1x128xf32> to vector<512x128xf32>
    %32 = arith.addf %30, %31 : vector<512x128xf32>
    %cst_23 = arith.constant dense<0xFF800000> : vector<512xf32>
    %33 = vector.multi_reduction <maximumf>, %32, %cst_23 [1] : vector<512x128xf32> to vector<512xf32>
    %34 = vector.shape_cast %33 : vector<512xf32> to vector<512x1xf32>
    %35 = vector.broadcast %34 : vector<512x1xf32> to vector<512x128xf32>
    %36 = arith.subf %32, %35 : vector<512x128xf32>
    %37 = math.exp %36 : vector<512x128xf32>
    %cst_24 = arith.constant dense<0.000000e+00> : vector<512xf32>
    %38 = vector.multi_reduction <add>, %37, %cst_24 [1] : vector<512x128xf32> to vector<512xf32>
    %39 = vector.shape_cast %38 : vector<512xf32> to vector<512x1xf32>
    %40 = tpu.reciprocal %39 {approx = true} : vector<512x1xf32> -> vector<512x1xf32>
    %41 = vector.broadcast %40 : vector<512x1xf32> to vector<512x128xf32>
    %42 = arith.mulf %37, %41 : vector<512x128xf32>
    %c0_25 = arith.constant 0 : index
    %c0_26 = arith.constant 0 : index
    %43 = vector.load %arg10[%c0_25, %c0_26] : memref<512x128xf32, #tpu.memory_space<vmem>>, vector<512x128xf32>
    tpu.vector_store %arg10[%c0_25, %c0_26], %42 {strides = array<i32>} : memref<512x128xf32, #tpu.memory_space<vmem>>, vector<512x128xf32>,
    return
  }
  func.func @transform_0(%arg0: i32) -> (i32, i32) {
    %c0_i32 = arith.constant 0 : i32
    %c0_i32_0 = arith.constant 0 : i32
    return %arg0, %c0_i32 : i32, i32
  }
  func.func @transform_1(%arg0: i32) -> (i32, i32) {
    %c0_i32 = arith.constant 0 : i32
    %c0_i32_0 = arith.constant 0 : i32
    %c0_i32_1 = arith.constant 0 : i32
    return %c0_i32, %c0_i32_0 : i32, i32
  }
  func.func @transform_2(%arg0: i32) -> (i32, i32) {
    %c0_i32 = arith.constant 0 : i32
    %c0_i32_0 = arith.constant 0 : i32
    %c0_i32_1 = arith.constant 0 : i32
    return %c0_i32, %c0_i32_0 : i32, i32
  }
  func.func @transform_3(%arg0: i32) -> (i32, i32) {
    %c0_i32 = arith.constant 0 : i32
    %c0_i32_0 = arith.constant 0 : i32
    %c0_i32_1 = arith.constant 0 : i32
    return %c0_i32, %c0_i32_0 : i32, i32
  }
  func.func @transform_4(%arg0: i32) -> (i32, i32) {
    %c0_i32 = arith.constant 0 : i32
    %c0_i32_0 = arith.constant 0 : i32
    %c0_i32_1 = arith.constant 0 : i32
    return %c0_i32, %c0_i32_0 : i32, i32
  }
  func.func @transform_5(%arg0: i32) -> (i32, i32) {
    %c0_i32 = arith.constant 0 : i32
    %c0_i32_0 = arith.constant 0 : i32
    %c0_i32_1 = arith.constant 0 : i32
    return %c0_i32, %c0_i32_0 : i32, i32
  }
  func.func @transform_6(%arg0: i32) -> (i32, i32) {
    %c0_i32 = arith.constant 0 : i32
    %c0_i32_0 = arith.constant 0 : i32
    %c0_i32_1 = arith.constant 0 : i32
    return %c0_i32, %c0_i32_0 : i32, i32
  }
  func.func @transform_7(%arg0: i32) -> (i32, i32) {
    %c0_i32 = arith.constant 0 : i32
    %c0_i32_0 = arith.constant 0 : i32
    %c0_i32_1 = arith.constant 0 : i32
    return %c0_i32, %c0_i32_0 : i32, i32
  }
  func.func @transform_8(%arg0: i32) -> (i32, i32) {
    %c0_i32 = arith.constant 0 : i32
    %c0_i32_0 = arith.constant 0 : i32
    %c0_i32_1 = arith.constant 0 : i32
    return %c0_i32, %c0_i32_0 : i32, i32
  }
  func.func @transform_9(%arg0: i32) -> (i32, i32) {
    %c0_i32 = arith.constant 0 : i32
    %c0_i32_0 = arith.constant 0 : i32
    return %arg0, %c0_i32 : i32, i32
  }
}

</mosaic_0001>

<llo_original>
// kernel: tpu_custom_call.1
$region0: #{tpu_custom_call.1}
  #allocation0 [shape = 'u32[]', space=smem, size = 0x4, offset = 0x4, fixed_abs, tag = 'smem constant byte address 0x4 - core index']
  #allocation1 [shape = 'u32[144,128]{1,0:T(1,128)}', space=vmem, size = 0x12000, scoped, tag = 'internal scratch']
  %s0 = inlined_call_operand.vmem [shape: f32[512,64], index: 0, kind: input, shape index: {}]
  %s1 = inlined_call_operand.vmem [shape: bf16[64,128], index: 1, kind: input, shape index: {}]
  %s2 = inlined_call_operand.vmem [shape: f32[1,128], index: 2, kind: input, shape index: {}]
  %s3 = inlined_call_operand.vmem [shape: bf16[128,256], index: 3, kind: input, shape index: {}]
  %s4 = inlined_call_operand.vmem [shape: f32[1,256], index: 4, kind: input, shape index: {}]
  %s5 = inlined_call_operand.vmem [shape: bf16[256,128], index: 5, kind: input, shape index: {}]
  %s6 = inlined_call_operand.vmem [shape: f32[1,128], index: 6, kind: input, shape index: {}]
  %s7 = inlined_call_operand.vmem [shape: bf16[128,128], index: 7, kind: input, shape index: {}]
  %s8 = inlined_call_operand.vmem [shape: f32[1,128], index: 8, kind: input, shape index: {}]
  %s9 = inlined_call_operand.hbm [shape: f32[512,128], index: 9, kind: output, shape index: {}]
  %s10 = sld [smem:[#allocation0]]
  $region46: #{tpu_custom_call.1} parent=0
    _
  %s12 = ssub.s32 1, %s10
  %s13 = scalar_select 0, %s12, %s10
  $region1: #{tpu_custom_call.1} parent=0
    #allocation2 [shape = 'u8[262144]{0}', space=vmem, size = 0x40000, scoped, tag = 'output window, operand 0, single buffered']
    #allocation3 [shape = 's32[1]{0}', space=sflag, size = 0x4, scoped, tag = 'scoped memory for tpu_custom_call.1']
    %14 = vsyncpa [#allocation3], 0
    // Predicated region
    $region2: #{tpu_custom_call.1} parent=1 // pred_check
      _
    $region3: #{tpu_custom_call.1} parent=1 // pred_check_branch
      %16 = sbr.rel (0) target = $region5
    $region4: #{tpu_custom_call.1} parent=1 // pred_region
      _
    $region5: #{tpu_custom_call.1} parent=1 // pred_fallthru
      _
    // Predicated region
    $region6: #{tpu_custom_call.1} parent=1 // pred_check
      _
    $region7: #{tpu_custom_call.1} parent=1 // pred_check_branch
      %18 = sbr.rel (0) target = $region9
    $region8: #{tpu_custom_call.1} parent=1 // pred_region
      _
    $region9: #{tpu_custom_call.1} parent=1 // pred_fallthru
      _
    // Predicated region
    $region10: #{tpu_custom_call.1} parent=1 // pred_check
      _
    $region11: #{tpu_custom_call.1} parent=1 // pred_check_branch
      %20 = sbr.rel (0) target = $region13
    $region12: #{tpu_custom_call.1} parent=1 // pred_region
      _
    $region13: #{tpu_custom_call.1} parent=1 // pred_fallthru
      _
    // Predicated region
    $region14: #{tpu_custom_call.1} parent=1 // pred_check
      _
    $region15: #{tpu_custom_call.1} parent=1 // pred_check_branch
      %22 = sbr.rel (0) target = $region17
    $region16: #{tpu_custom_call.1} parent=1 // pred_region
      _
    $region17: #{tpu_custom_call.1} parent=1 // pred_fallthru
      _
    // Predicated region
    $region18: #{tpu_custom_call.1} parent=1 // pred_check
      _
    $region19: #{tpu_custom_call.1} parent=1 // pred_check_branch
      %24 = sbr.rel (0) target = $region21
    $region20: #{tpu_custom_call.1} parent=1 // pred_region
      _
    $region21: #{tpu_custom_call.1} parent=1 // pred_fallthru
      _
    // Predicated region
    $region22: #{tpu_custom_call.1} parent=1 // pred_check
      _
    $region23: #{tpu_custom_call.1} parent=1 // pred_check_branch
      %26 = sbr.rel (0) target = $region25
    $region24: #{tpu_custom_call.1} parent=1 // pred_region
      _
    $region25: #{tpu_custom_call.1} parent=1 // pred_fallthru
      _
    // Predicated region
    $region26: #{tpu_custom_call.1} parent=1 // pred_check
      _
    $region27: #{tpu_custom_call.1} parent=1 // pred_check_branch
      %28 = sbr.rel (0) target = $region29
    $region28: #{tpu_custom_call.1} parent=1 // pred_region
      _
    $region29: #{tpu_custom_call.1} parent=1 // pred_fallthru
      _
    // Predicated region
    $region30: #{tpu_custom_call.1} parent=1 // pred_check
      _
    $region31: #{tpu_custom_call.1} parent=1 // pred_check_branch
      %30 = sbr.rel (0) target = $region33
    $region32: #{tpu_custom_call.1} parent=1 // pred_region
      _
    $region33: #{tpu_custom_call.1} parent=1 // pred_fallthru
      _
    // Predicated region
    $region34: #{tpu_custom_call.1} parent=1 // pred_check
      _
    $region35: #{tpu_custom_call.1} parent=1 // pred_check_branch
      %32 = sbr.rel (0) target = $region37
    $region36: #{tpu_custom_call.1} parent=1 // pred_region
      _
    $region37: #{tpu_custom_call.1} parent=1 // pred_fallthru
      _
    %v34 = vld [vmem:[%s0] sm:$0xff]
    %v35 = vld [vmem:[%s0 + $0x8] sm:$0xff]
    %v36 = vld [vmem:[%s0 + $0x10] sm:$0xff]
    %v37 = vld [vmem:[%s0 + $0x18] sm:$0xff]
    %v38 = vld [vmem:[%s0 + $0x20] sm:$0xff]
    %v39 = vld [vmem:[%s0 + $0x28] sm:$0xff]
    %v40 = vld [vmem:[%s0 + $0x30] sm:$0xff]
    %v41 = vld [vmem:[%s0 + $0x38] sm:$0xff]
    %v42 = vld [vmem:[%s0 + $0x40] sm:$0xff]
    %v43 = vld [vmem:[%s0 + $0x48] sm:$0xff]
    %v44 = vld [vmem:[%s0 + $0x50] sm:$0xff]
    %v45 = vld [vmem:[%s0 + $0x58] sm:$0xff]
    %v46 = vld [vmem:[%s0 + $0x60] sm:$0xff]
    %v47 = vld [vmem:[%s0 + $0x68] sm:$0xff]
    %v48 = vld [vmem:[%s0 + $0x70] sm:$0xff]
    %v49 = vld [vmem:[%s0 + $0x78] sm:$0xff]
    %v50 = vld [vmem:[%s0 + $0x80] sm:$0xff]
    %v51 = vld [vmem:[%s0 + $0x88] sm:$0xff]
    %v52 = vld [vmem:[%s0 + $0x90] sm:$0xff]
    %v53 = vld [vmem:[%s0 + $0x98] sm:$0xff]
    %v54 = vld [vmem:[%s0 + $0xa0] sm:$0xff]
    %v55 = vld [vmem:[%s0 + $0xa8] sm:$0xff]
    %v56 = vld [vmem:[%s0 + $0xb0] sm:$0xff]
    %v57 = vld [vmem:[%s0 + $0xb8] sm:$0xff]
    %v58 = vld [vmem:[%s0 + $0xc0] sm:$0xff]
    %v59 = vld [vmem:[%s0 + $0xc8] sm:$0xff]
    %v60 = vld [vmem:[%s0 + $0xd0] sm:$0xff]
    %v61 = vld [vmem:[%s0 + $0xd8] sm:$0xff]
    %v62 = vld [vmem:[%s0 + $0xe0] sm:$0xff]
    %v63 = vld [vmem:[%s0 + $0xe8] sm:$0xff]
    %v64 = vld [vmem:[%s0 + $0xf0] sm:$0xff]
    %v65 = vld [vmem:[%s0 + $0xf8] sm:$0xff]
    %v66 = vld [vmem:[%s0 + $0x100] sm:$0xff]
    %v67 = vld [vmem:[%s0 + $0x108] sm:$0xff]
    %v68 = vld [vmem:[%s0 + $0x110] sm:$0xff]
    %v69 = vld [vmem:[%s0 + $0x118] sm:$0xff]
    %v70 = vld [vmem:[%s0 + $0x120] sm:$0xff]
    %v71 = vld [vmem:[%s0 + $0x128] sm:$0xff]
    %v72 = vld [vmem:[%s0 + $0x130] sm:$0xff]
    %v73 = vld [vmem:[%s0 + $0x138] sm:$0xff]
    %v74 = vld [vmem:[%s0 + $0x140] sm:$0xff]
    %v75 = vld [vmem:[%s0 + $0x148] sm:$0xff]
    %v76 = vld [vmem:[%s0 + $0x150] sm:$0xff]
    %v77 = vld [vmem:[%s0 + $0x158] sm:$0xff]
    %v78 = vld [vmem:[%s0 + $0x160] sm:$0xff]
    %v79 = vld [vmem:[%s0 + $0x168] sm:$0xff]
    %v80 = vld [vmem:[%s0 + $0x170] sm:$0xff]
    %v81 = vld [vmem:[%s0 + $0x178] sm:$0xff]
    %v82 = vld [vmem:[%s0 + $0x180] sm:$0xff]
    %v83 = vld [vmem:[%s0 + $0x188] sm:$0xff]
    %v84 = vld [vmem:[%s0 + $0x190] sm:$0xff]
    %v85 = vld [vmem:[%s0 + $0x198] sm:$0xff]
    %v86 = vld [vmem:[%s0 + $0x1a0] sm:$0xff]
    %v87 = vld [vmem:[%s0 + $0x1a8] sm:$0xff]
    %v88 = vld [vmem:[%s0 + $0x1b0] sm:$0xff]
    %v89 = vld [vmem:[%s0 + $0x1b8] sm:$0xff]
    %v90 = vld [vmem:[%s0 + $0x1c0] sm:$0xff]
    %v91 = vld [vmem:[%s0 + $0x1c8] sm:$0xff]
    %v92 = vld [vmem:[%s0 + $0x1d0] sm:$0xff]
    %v93 = vld [vmem:[%s0 + $0x1d8] sm:$0xff]
    %v94 = vld [vmem:[%s0 + $0x1e0] sm:$0xff]
    %v95 = vld [vmem:[%s0 + $0x1e8] sm:$0xff]
    %v96 = vld [vmem:[%s0 + $0x1f0] sm:$0xff]
    %v97 = vld [vmem:[%s0 + $0x1f8] sm:$0xff]
    %v98 = vpack.c.bf16 %v35, %v34
    %v99 = vpack.c.bf16 %v37, %v36
    %v100 = vpack.c.bf16 %v39, %v38
    %v101 = vpack.c.bf16 %v41, %v40
    %v102 = vpack.c.bf16 %v43, %v42
    %v103 = vpack.c.bf16 %v45, %v44
    %v104 = vpack.c.bf16 %v47, %v46
    %v105 = vpack.c.bf16 %v49, %v48
    %v106 = vpack.c.bf16 %v51, %v50
    %v107 = vpack.c.bf16 %v53, %v52
    %v108 = vpack.c.bf16 %v55, %v54
    %v109 = vpack.c.bf16 %v57, %v56
    %v110 = vpack.c.bf16 %v59, %v58
    %v111 = vpack.c.bf16 %v61, %v60
    %v112 = vpack.c.bf16 %v63, %v62
    %v113 = vpack.c.bf16 %v65, %v64
    %v114 = vpack.c.bf16 %v67, %v66
    %v115 = vpack.c.bf16 %v69, %v68
    %v116 = vpack.c.bf16 %v71, %v70
    %v117 = vpack.c.bf16 %v73, %v72
    %v118 = vpack.c.bf16 %v75, %v74
    %v119 = vpack.c.bf16 %v77, %v76
    %v120 = vpack.c.bf16 %v79, %v78
    %v121 = vpack.c.bf16 %v81, %v80
    %v122 = vpack.c.bf16 %v83, %v82
    %v123 = vpack.c.bf16 %v85, %v84
    %v124 = vpack.c.bf16 %v87, %v86
    %v125 = vpack.c.bf16 %v89, %v88
    %v126 = vpack.c.bf16 %v91, %v90
    %v127 = vpack.c.bf16 %v93, %v92
    %v128 = vpack.c.bf16 %v95, %v94
    %v129 = vpack.c.bf16 %v97, %v96
    %v130 = vld [vmem:[%s2] sm:$0x1]
    %v131 = vld [vmem:[%s4] sm:$0x3]
    %v132 = vld [vmem:[%s6] sm:$0x1]
    %v133 = vld [vmem:[%s8] sm:$0x1]
    %v134 = vld [vmem:[%s1] sm:$0xf]
    %v135 = vld [vmem:[%s1 + $0x4] sm:$0xf]
    %v136 = vld [vmem:[%s1 + $0x8] sm:$0xf]
    %v137 = vld [vmem:[%s1 + $0xc] sm:$0xf]
    %v138 = vld [vmem:[%s1 + $0x10] sm:$0xf]
    %v139 = vld [vmem:[%s1 + $0x14] sm:$0xf]
    %v140 = vld [vmem:[%s1 + $0x18] sm:$0xf]
    %v141 = vld [vmem:[%s1 + $0x1c] sm:$0xf]
    %v143 = vlaneseq
    %v144 = vshrl.u32 %v143, 7
    %v145 = vsub.s32 0, %v144
    %v146 = vrot.slane %v130, %v145
    %v156 = vunpack.c.l.b16 %v134
    %v157 = vunpack.c.l.b16 %v135
    %v158 = vunpack.c.l.b16 %v136
    %v159 = vunpack.c.l.b16 %v137
    %v160 = vunpack.c.l.b16 %v138
    %v161 = vunpack.c.l.b16 %v139
    %v162 = vunpack.c.l.b16 %v140
    %v163 = vunpack.c.l.b16 %v141
    %v164 = vpack.c.b16 %v157, %v156
    %v165 = vpack.c.b16 %v159, %v158
    %v166 = vpack.c.b16 %v161, %v160
    %v167 = vpack.c.b16 %v163, %v162
    %vm172 = vcmask 523264
    %v174 = vsel %vm172, %v98, 0
    %v177 = vsel %vm172, %v99, 0
    %v180 = vsel %vm172, %v100, 0
    %v183 = vsel %vm172, %v101, 0
    %v186 = vsel %vm172, %v102, 0
    %v189 = vsel %vm172, %v103, 0
    %v192 = vsel %vm172, %v104, 0
    %v195 = vsel %vm172, %v105, 0
    %v198 = vsel %vm172, %v106, 0
    %v201 = vsel %vm172, %v107, 0
    %v204 = vsel %vm172, %v108, 0
    %v207 = vsel %vm172, %v109, 0
    %v210 = vsel %vm172, %v110, 0
    %v213 = vsel %vm172, %v111, 0
    %v216 = vsel %vm172, %v112, 0
    %v219 = vsel %vm172, %v113, 0
    %v222 = vsel %vm172, %v114, 0
    %v225 = vsel %vm172, %v115, 0
    %v228 = vsel %vm172, %v116, 0
    %v231 = vsel %vm172, %v117, 0
    %v234 = vsel %vm172, %v118, 0
    %v237 = vsel %vm172, %v119, 0
    %v240 = vsel %vm172, %v120, 0
    %v243 = vsel %vm172, %v121, 0
    %v246 = vsel %vm172, %v122, 0
    %v249 = vsel %vm172, %v123, 0
    %v252 = vsel %vm172, %v124, 0
    %v255 = vsel %vm172, %v125, 0
    %v258 = vsel %vm172, %v126, 0
    %v261 = vsel %vm172, %v127, 0
    %v264 = vsel %vm172, %v128, 0
    %v267 = vsel %vm172, %v129, 0
    %269 = vmatprep.subr.bf16.mxu0 0
    %270 = vmatpush1.bf16.msra.mxu0 %v164
    %271 = vmatprep.subr.bf16.mxu0 0
    %272 = vmatpush1.bf16.msra.mxu0 %v165
    %273 = vmatprep.subr.bf16.mxu0 0
    %274 = vmatpush1.bf16.msra.mxu0 %v166
    %275 = vmatprep.subr.bf16.mxu0 0
    %276 = vmatpush1.bf16.msra.mxu0 %v167
    %277 = vmatprep.subr.bf16.mxu0 0
    %278 = vmatpush1.bf16.msra.mxu0 0
    %279 = vmatprep.subr.bf16.mxu0 0
    %280 = vmatpush1.bf16.msra.mxu0 0
    %281 = vmatprep.subr.bf16.mxu0 0
    %282 = vmatpush1.bf16.msra.mxu0 0
    %283 = vmatprep.subr.bf16.mxu0 0
    %284 = vmatpush1.bf16.msra.mxu0 0
    %285 = vmatprep.subr.bf16.mxu0 0
    %286 = vmatpush1.bf16.msra.mxu0 0
    %287 = vmatprep.subr.bf16.mxu0 0
    %288 = vmatpush1.bf16.msra.mxu0 0
    %289 = vmatprep.subr.bf16.mxu0 0
    %290 = vmatpush1.bf16.msra.mxu0 0
    %291 = vmatprep.subr.bf16.mxu0 0
    %292 = vmatpush1.bf16.msra.mxu0 0
    %293 = vmatprep.subr.bf16.mxu0 0
    %294 = vmatpush1.bf16.msra.mxu0 0
    %295 = vmatprep.subr.bf16.mxu0 0
    %296 = vmatpush1.bf16.msra.mxu0 0
    %297 = vmatprep.subr.bf16.mxu0 0
    %298 = vmatpush1.bf16.msra.mxu0 0
    %299 = vmatprep.subr.bf16.mxu0 0
    %300 = vmatpush1.bf16.msra.mxu0 0
    %301 = vmatprep.mubr.bf16.mxu0 0
    %302 = vmatmul.mubr.bf16.gmra.mrb[0].mxu0 %v174
    %v303 = vpop.f32.mrb[0].mxu0
    %v304 = vadd.f32 %v146, %v303
    %v305 = vpop.f32.mrb[0].mxu0
    %v306 = vpop.f32.mrb[0].mxu0
    %v307 = vadd.f32 %v146, %v306
    %v308 = vpop.f32.mrb[0].mxu0
    %309 = vmatprep.mubr.bf16.mxu0 0
    %310 = vmatmul.mubr.bf16.gmra.mrb[0].mxu0 %v177
    %v311 = vpop.f32.mrb[0].mxu0
    %v312 = vadd.f32 %v146, %v311
    %v313 = vpop.f32.mrb[0].mxu0
    %v314 = vpop.f32.mrb[0].mxu0
    %v315 = vadd.f32 %v146, %v314
    %v316 = vpop.f32.mrb[0].mxu0
    %317 = vmatprep.mubr.bf16.mxu0 0
    %318 = vmatmul.mubr.bf16.gmra.mrb[0].mxu0 %v180
    %v319 = vpop.f32.mrb[0].mxu0
    %v320 = vadd.f32 %v146, %v319
    %v321 = vpop.f32.mrb[0].mxu0
    %v322 = vpop.f32.mrb[0].mxu0
    %v323 = vadd.f32 %v146, %v322
    %v324 = vpop.f32.mrb[0].mxu0
    %325 = vmatprep.mubr.bf16.mxu0 0
    %326 = vmatmul.mubr.bf16.gmra.mrb[0].mxu0 %v183
    %v327 = vpop.f32.mrb[0].mxu0
    %v328 = vadd.f32 %v146, %v327
    %v329 = vpop.f32.mrb[0].mxu0
    %v330 = vpop.f32.mrb[0].mxu0
    %v331 = vadd.f32 %v146, %v330
    %v332 = vpop.f32.mrb[0].mxu0
    %333 = vmatprep.mubr.bf16.mxu0 0
    %334 = vmatmul.mubr.bf16.gmra.mrb[0].mxu0 %v186
    %v335 = vpop.f32.mrb[0].mxu0
    %v336 = vadd.f32 %v146, %v335
    %v337 = vpop.f32.mrb[0].mxu0
    %v338 = vpop.f32.mrb[0].mxu0
    %v339 = vadd.f32 %v146, %v338
    %v340 = vpop.f32.mrb[0].mxu0
    %341 = vmatprep.mubr.bf16.mxu0 0
    %342 = vmatmul.mubr.bf16.gmra.mrb[0].mxu0 %v189
    %v343 = vpop.f32.mrb[0].mxu0
    %v344 = vadd.f32 %v146, %v343
    %v345 = vpop.f32.mrb[0].mxu0
    %v346 = vpop.f32.mrb[0].mxu0
    %v347 = vadd.f32 %v146, %v346
    %v348 = vpop.f32.mrb[0].mxu0
    %349 = vmatprep.mubr.bf16.mxu0 0
    %350 = vmatmul.mubr.bf16.gmra.mrb[0].mxu0 %v192
    %v351 = vpop.f32.mrb[0].mxu0
    %v352 = vadd.f32 %v146, %v351
    %v353 = vpop.f32.mrb[0].mxu0
    %v354 = vpop.f32.mrb[0].mxu0
    %v355 = vadd.f32 %v146, %v354
    %v356 = vpop.f32.mrb[0].mxu0
    %357 = vmatprep.mubr.bf16.mxu0 0
    %358 = vmatmul.mubr.bf16.gmra.mrb[0].mxu0 %v195
    %v359 = vpop.f32.mrb[0].mxu0
    %v360 = vadd.f32 %v146, %v359
    %v361 = vpop.f32.mrb[0].mxu0
    %v362 = vpop.f32.mrb[0].mxu0
    %v363 = vadd.f32 %v146, %v362
    %v364 = vpop.f32.mrb[0].mxu0
    %365 = vmatprep.mubr.bf16.mxu0 0
    %366 = vmatmul.mubr.bf16.gmra.mrb[0].mxu0 %v198
    %v367 = vpop.f32.mrb[0].mxu0
    %v368 = vadd.f32 %v146, %v367
    %v369 = vpop.f32.mrb[0].mxu0
    %v370 = vpop.f32.mrb[0].mxu0
    %v371 = vadd.f32 %v146, %v370
    %v372 = vpop.f32.mrb[0].mxu0
    %373 = vmatprep.mubr.bf16.mxu0 0
    %374 = vmatmul.mubr.bf16.gmra.mrb[0].mxu0 %v201
    %v375 = vpop.f32.mrb[0].mxu0
    %v376 = vadd.f32 %v146, %v375
    %v377 = vpop.f32.mrb[0].mxu0
    %v378 = vpop.f32.mrb[0].mxu0
    %v379 = vadd.f32 %v146, %v378
    %v380 = vpop.f32.mrb[0].mxu0
    %381 = vmatprep.mubr.bf16.mxu0 0
    %382 = vmatmul.mubr.bf16.gmra.mrb[0].mxu0 %v204
    %v383 = vpop.f32.mrb[0].mxu0
    %v384 = vadd.f32 %v146, %v383
    %v385 = vpop.f32.mrb[0].mxu0
    %v386 = vpop.f32.mrb[0].mxu0
    %v387 = vadd.f32 %v146, %v386
    %v388 = vpop.f32.mrb[0].mxu0
    %389 = vmatprep.mubr.bf16.mxu0 0
    %390 = vmatmul.mubr.bf16.gmra.mrb[0].mxu0 %v207
    %v391 = vpop.f32.mrb[0].mxu0
    %v392 = vadd.f32 %v146, %v391
    %v393 = vpop.f32.mrb[0].mxu0
    %v394 = vpop.f32.mrb[0].mxu0
    %v395 = vadd.f32 %v146, %v394
    %v396 = vpop.f32.mrb[0].mxu0
    %397 = vmatprep.mubr.bf16.mxu0 0
    %398 = vmatmul.mubr.bf16.gmra.mrb[0].mxu0 %v210
    %v399 = vpop.f32.mrb[0].mxu0
    %v400 = vadd.f32 %v146, %v399
    %v401 = vpop.f32.mrb[0].mxu0
    %v402 = vpop.f32.mrb[0].mxu0
    %v403 = vadd.f32 %v146, %v402
    %v404 = vpop.f32.mrb[0].mxu0
    %405 = vmatprep.mubr.bf16.mxu0 0
    %406 = vmatmul.mubr.bf16.gmra.mrb[0].mxu0 %v213
    %v407 = vpop.f32.mrb[0].mxu0
    %v408 = vadd.f32 %v146, %v407
    %v409 = vpop.f32.mrb[0].mxu0
    %v410 = vpop.f32.mrb[0].mxu0
    %v411 = vadd.f32 %v146, %v410
    %v412 = vpop.f32.mrb[0].mxu0
    %413 = vmatprep.mubr.bf16.mxu0 0
    %414 = vmatmul.mubr.bf16.gmra.mrb[0].mxu0 %v216
    %v415 = vpop.f32.mrb[0].mxu0
    %v416 = vadd.f32 %v146, %v415
    %v417 = vpop.f32.mrb[0].mxu0
    %v418 = vpop.f32.mrb[0].mxu0
    %v419 = vadd.f32 %v146, %v418
    %v420 = vpop.f32.mrb[0].mxu0
    %421 = vmatprep.mubr.bf16.mxu0 0
    %422 = vmatmul.mubr.bf16.gmra.mrb[0].mxu0 %v219
    %v423 = vpop.f32.mrb[0].mxu0
    %v424 = vadd.f32 %v146, %v423
    %v425 = vpop.f32.mrb[0].mxu0
    %v426 = vpop.f32.mrb[0].mxu0
    %v427 = vadd.f32 %v146, %v426
    %v428 = vpop.f32.mrb[0].mxu0
    %429 = vmatprep.mubr.bf16.mxu0 0
    %430 = vmatmul.mubr.bf16.gmra.mrb[0].mxu0 %v222
    %v431 = vpop.f32.mrb[0].mxu0
    %v432 = vadd.f32 %v146, %v431
    %v433 = vpop.f32.mrb[0].mxu0
    %v434 = vpop.f32.mrb[0].mxu0
    %v435 = vadd.f32 %v146, %v434
    %v436 = vpop.f32.mrb[0].mxu0
    %437 = vmatprep.mubr.bf16.mxu0 0
    %438 = vmatmul.mubr.bf16.gmra.mrb[0].mxu0 %v225
    %v439 = vpop.f32.mrb[0].mxu0
    %v440 = vadd.f32 %v146, %v439
    %v441 = vpop.f32.mrb[0].mxu0
    %v442 = vpop.f32.mrb[0].mxu0
    %v443 = vadd.f32 %v146, %v442
    %v444 = vpop.f32.mrb[0].mxu0
    %445 = vmatprep.mubr.bf16.mxu0 0
    %446 = vmatmul.mubr.bf16.gmra.mrb[0].mxu0 %v228
    %v447 = vpop.f32.mrb[0].mxu0
    %v448 = vadd.f32 %v146, %v447
    %v449 = vpop.f32.mrb[0].mxu0
    %v450 = vpop.f32.mrb[0].mxu0
    %v451 = vadd.f32 %v146, %v450
    %v452 = vpop.f32.mrb[0].mxu0
    %453 = vmatprep.mubr.bf16.mxu0 0
    %454 = vmatmul.mubr.bf16.gmra.mrb[0].mxu0 %v231
    %v455 = vpop.f32.mrb[0].mxu0
    %v456 = vadd.f32 %v146, %v455
    %v457 = vpop.f32.mrb[0].mxu0
    %v458 = vpop.f32.mrb[0].mxu0
    %v459 = vadd.f32 %v146, %v458
    %v460 = vpop.f32.mrb[0].mxu0
    %461 = vmatprep.mubr.bf16.mxu0 0
    %462 = vmatmul.mubr.bf16.gmra.mrb[0].mxu0 %v234
    %v463 = vpop.f32.mrb[0].mxu0
    %v464 = vadd.f32 %v146, %v463
    %v465 = vpop.f32.mrb[0].mxu0
    %v466 = vpop.f32.mrb[0].mxu0
    %v467 = vadd.f32 %v146, %v466
    %v468 = vpop.f32.mrb[0].mxu0
    %469 = vmatprep.mubr.bf16.mxu0 0
    %470 = vmatmul.mubr.bf16.gmra.mrb[0].mxu0 %v237
    %v471 = vpop.f32.mrb[0].mxu0
    %v472 = vadd.f32 %v146, %v471
    %v473 = vpop.f32.mrb[0].mxu0
    %v474 = vpop.f32.mrb[0].mxu0
    %v475 = vadd.f32 %v146, %v474
    %v476 = vpop.f32.mrb[0].mxu0
    %477 = vmatprep.mubr.bf16.mxu0 0
    %478 = vmatmul.mubr.bf16.gmra.mrb[0].mxu0 %v240
    %v479 = vpop.f32.mrb[0].mxu0
    %v480 = vadd.f32 %v146, %v479
    %v481 = vpop.f32.mrb[0].mxu0
    %v482 = vpop.f32.mrb[0].mxu0
    %v483 = vadd.f32 %v146, %v482
    %v484 = vpop.f32.mrb[0].mxu0
    %485 = vmatprep.mubr.bf16.mxu0 0
    %486 = vmatmul.mubr.bf16.gmra.mrb[0].mxu0 %v243
    %v487 = vpop.f32.mrb[0].mxu0
    %v488 = vadd.f32 %v146, %v487
    %v489 = vpop.f32.mrb[0].mxu0
    %v490 = vpop.f32.mrb[0].mxu0
    %v491 = vadd.f32 %v146, %v490
    %v492 = vpop.f32.mrb[0].mxu0
    %493 = vmatprep.mubr.bf16.mxu0 0
    %494 = vmatmul.mubr.bf16.gmra.mrb[0].mxu0 %v246
    %v495 = vpop.f32.mrb[0].mxu0
    %v496 = vadd.f32 %v146, %v495
    %v497 = vpop.f32.mrb[0].mxu0
    %v498 = vpop.f32.mrb[0].mxu0
    %v499 = vadd.f32 %v146, %v498
    %v500 = vpop.f32.mrb[0].mxu0
    %501 = vmatprep.mubr.bf16.mxu0 0
    %502 = vmatmul.mubr.bf16.gmra.mrb[0].mxu0 %v249
    %v503 = vpop.f32.mrb[0].mxu0
    %v504 = vadd.f32 %v146, %v503
    %v505 = vpop.f32.mrb[0].mxu0
    %v506 = vpop.f32.mrb[0].mxu0
    %v507 = vadd.f32 %v146, %v506
    %v508 = vpop.f32.mrb[0].mxu0
    %509 = vmatprep.mubr.bf16.mxu0 0
    %510 = vmatmul.mubr.bf16.gmra.mrb[0].mxu0 %v252
    %v511 = vpop.f32.mrb[0].mxu0
    %v512 = vadd.f32 %v146, %v511
    %v513 = vpop.f32.mrb[0].mxu0
    %v514 = vpop.f32.mrb[0].mxu0
    %v515 = vadd.f32 %v146, %v514
    %v516 = vpop.f32.mrb[0].mxu0
    %517 = vmatprep.mubr.bf16.mxu0 0
    %518 = vmatmul.mubr.bf16.gmra.mrb[0].mxu0 %v255
    %v519 = vpop.f32.mrb[0].mxu0
    %v520 = vadd.f32 %v146, %v519
    %v521 = vpop.f32.mrb[0].mxu0
    %v522 = vpop.f32.mrb[0].mxu0
    %v523 = vadd.f32 %v146, %v522
    %v524 = vpop.f32.mrb[0].mxu0
    %525 = vmatprep.mubr.bf16.mxu0 0
    %526 = vmatmul.mubr.bf16.gmra.mrb[0].mxu0 %v258
    %v527 = vpop.f32.mrb[0].mxu0
    %v528 = vadd.f32 %v146, %v527
    %v529 = vpop.f32.mrb[0].mxu0
    %v530 = vpop.f32.mrb[0].mxu0
    %v531 = vadd.f32 %v146, %v530
    %v532 = vpop.f32.mrb[0].mxu0
    %533 = vmatprep.mubr.bf16.mxu0 0
    %534 = vmatmul.mubr.bf16.gmra.mrb[0].mxu0 %v261
    %v535 = vpop.f32.mrb[0].mxu0
    %v536 = vadd.f32 %v146, %v535
    %v537 = vpop.f32.mrb[0].mxu0
    %v538 = vpop.f32.mrb[0].mxu0
    %v539 = vadd.f32 %v146, %v538
    %v540 = vpop.f32.mrb[0].mxu0
    %541 = vmatprep.mubr.bf16.mxu0 0
    %542 = vmatmul.mubr.bf16.gmra.mrb[0].mxu0 %v264
    %v543 = vpop.f32.mrb[0].mxu0
    %v544 = vadd.f32 %v146, %v543
    %v545 = vpop.f32.mrb[0].mxu0
    %v546 = vpop.f32.mrb[0].mxu0
    %v547 = vadd.f32 %v146, %v546
    %v548 = vpop.f32.mrb[0].mxu0
    %549 = vmatprep.mubr.bf16.mxu0 0
    %550 = vmatmul.mubr.bf16.gmra.mrb[0].mxu0 %v267
    %v551 = vpop.f32.mrb[0].mxu0
    %v552 = vadd.f32 %v146, %v551
    %v553 = vpop.f32.mrb[0].mxu0
    %v554 = vpop.f32.mrb[0].mxu0
    %v555 = vadd.f32 %v146, %v554
    %v556 = vpop.f32.mrb[0].mxu0
    %557 = vdwg.mxu0
    %v558 = vmax.f32 %v304, 0.0
    %v559 = vmax.f32 %v307, 0.0
    %v560 = vmax.f32 %v312, 0.0
    %v561 = vmax.f32 %v315, 0.0
    %v562 = vmax.f32 %v320, 0.0
    %v563 = vmax.f32 %v323, 0.0
    %v564 = vmax.f32 %v328, 0.0
    %v565 = vmax.f32 %v331, 0.0
    %v566 = vmax.f32 %v336, 0.0
    %v567 = vmax.f32 %v339, 0.0
    %v568 = vmax.f32 %v344, 0.0
    %v569 = vmax.f32 %v347, 0.0
    %v570 = vmax.f32 %v352, 0.0
    %v571 = vmax.f32 %v355, 0.0
    %v572 = vmax.f32 %v360, 0.0
    %v573 = vmax.f32 %v363, 0.0
    %v574 = vmax.f32 %v368, 0.0
    %v575 = vmax.f32 %v371, 0.0
    %v576 = vmax.f32 %v376, 0.0
    %v577 = vmax.f32 %v379, 0.0
    %v578 = vmax.f32 %v384, 0.0
    %v579 = vmax.f32 %v387, 0.0
    %v580 = vmax.f32 %v392, 0.0
    %v581 = vmax.f32 %v395, 0.0
    %v582 = vmax.f32 %v400, 0.0
    %v583 = vmax.f32 %v403, 0.0
    %v584 = vmax.f32 %v408, 0.0
    %v585 = vmax.f32 %v411, 0.0
    %v586 = vmax.f32 %v416, 0.0
    %v587 = vmax.f32 %v419, 0.0
    %v588 = vmax.f32 %v424, 0.0
    %v589 = vmax.f32 %v427, 0.0
    %v590 = vmax.f32 %v432, 0.0
    %v591 = vmax.f32 %v435, 0.0
    %v592 = vmax.f32 %v440, 0.0
    %v593 = vmax.f32 %v443, 0.0
    %v594 = vmax.f32 %v448, 0.0
    %v595 = vmax.f32 %v451, 0.0
    %v596 = vmax.f32 %v456, 0.0
    %v597 = vmax.f32 %v459, 0.0
    %v598 = vmax.f32 %v464, 0.0
    %v599 = vmax.f32 %v467, 0.0
    %v600 = vmax.f32 %v472, 0.0
    %v601 = vmax.f32 %v475, 0.0
    %v602 = vmax.f32 %v480, 0.0
    %v603 = vmax.f32 %v483, 0.0
    %v604 = vmax.f32 %v488, 0.0
    %v605 = vmax.f32 %v491, 0.0
    %v606 = vmax.f32 %v496, 0.0
    %v607 = vmax.f32 %v499, 0.0
    %v608 = vmax.f32 %v504, 0.0
    %v609 = vmax.f32 %v507, 0.0
    %v610 = vmax.f32 %v512, 0.0
    %v611 = vmax.f32 %v515, 0.0
    %v612 = vmax.f32 %v520, 0.0
    %v613 = vmax.f32 %v523, 0.0
    %v614 = vmax.f32 %v528, 0.0
    %v615 = vmax.f32 %v531, 0.0
    %v616 = vmax.f32 %v536, 0.0
    %v617 = vmax.f32 %v539, 0.0
    %v618 = vmax.f32 %v544, 0.0
    %v619 = vmax.f32 %v547, 0.0
    %v620 = vmax.f32 %v552, 0.0
    %v621 = vmax.f32 %v555, 0.0
    %v622 = vpack.c.bf16 %v559, %v558
    %v623 = vpack.c.bf16 %v561, %v560
    %v624 = vpack.c.bf16 %v563, %v562
    %v625 = vpack.c.bf16 %v565, %v564
    %v626 = vpack.c.bf16 %v567, %v566
    %v627 = vpack.c.bf16 %v569, %v568
    %v628 = vpack.c.bf16 %v571, %v570
    %v629 = vpack.c.bf16 %v573, %v572
    %v630 = vpack.c.bf16 %v575, %v574
    %v631 = vpack.c.bf16 %v577, %v576
    %v632 = vpack.c.bf16 %v579, %v578
    %v633 = vpack.c.bf16 %v581, %v580
    %v634 = vpack.c.bf16 %v583, %v582
    %v635 = vpack.c.bf16 %v585, %v584
    %v636 = vpack.c.bf16 %v587, %v586
    %v637 = vpack.c.bf16 %v589, %v588
    %v638 = vpack.c.bf16 %v591, %v590
    %v639 = vpack.c.bf16 %v593, %v592
    %v640 = vpack.c.bf16 %v595, %v594
    %v641 = vpack.c.bf16 %v597, %v596
    %v642 = vpack.c.bf16 %v599, %v598
    %v643 = vpack.c.bf16 %v601, %v600
    %v644 = vpack.c.bf16 %v603, %v602
    %v645 = vpack.c.bf16 %v605, %v604
    %v646 = vpack.c.bf16 %v607, %v606
    %v647 = vpack.c.bf16 %v609, %v608
    %v648 = vpack.c.bf16 %v611, %v610
    %v649 = vpack.c.bf16 %v613, %v612
    %v650 = vpack.c.bf16 %v615, %v614
    %v651 = vpack.c.bf16 %v617, %v616
    %v652 = vpack.c.bf16 %v619, %v618
    %v653 = vpack.c.bf16 %v621, %v620
    %v654 = vld [vmem:[%s3] sm:$0xff]
    %v655 = vld [vmem:[%s3 + $0x8] sm:$0xff]
    %v656 = vld [vmem:[%s3 + $0x10] sm:$0xff]
    %v657 = vld [vmem:[%s3 + $0x18] sm:$0xff]
    %v658 = vld [vmem:[%s3 + $0x20] sm:$0xff]
    %v659 = vld [vmem:[%s3 + $0x28] sm:$0xff]
    %v660 = vld [vmem:[%s3 + $0x30] sm:$0xff]
    %v661 = vld [vmem:[%s3 + $0x38] sm:$0xff]
    %v662 = vld [vmem:[%s3 + $0x40] sm:$0xff]
    %v663 = vld [vmem:[%s3 + $0x48] sm:$0xff]
    %v664 = vld [vmem:[%s3 + $0x50] sm:$0xff]
    %v665 = vld [vmem:[%s3 + $0x58] sm:$0xff]
    %v666 = vld [vmem:[%s3 + $0x60] sm:$0xff]
    %v667 = vld [vmem:[%s3 + $0x68] sm:$0xff]
    %v668 = vld [vmem:[%s3 + $0x70] sm:$0xff]
    %v669 = vld [vmem:[%s3 + $0x78] sm:$0xff]
    %v671 = vlaneseq
    %v672 = vshrl.u32 %v671, 7
    %v673 = vsub.s32 0, %v672
    %v674 = vrot.slane %v131, %v673
    %v675 = vlaneseq
    %v676 = vshrl.u32 %v675, 7
    %v677 = vsub.s32 1, %v676
    %v678 = vrot.slane %v131, %v677
    %v697 = vunpack.c.l.b16 %v654
    %v698 = vunpack.c.h.b16 %v654
    %v699 = vunpack.c.l.b16 %v655
    %v700 = vunpack.c.h.b16 %v655
    %v701 = vunpack.c.l.b16 %v656
    %v702 = vunpack.c.h.b16 %v656
    %v703 = vunpack.c.l.b16 %v657
    %v704 = vunpack.c.h.b16 %v657
    %v705 = vunpack.c.l.b16 %v658
    %v706 = vunpack.c.h.b16 %v658
    %v707 = vunpack.c.l.b16 %v659
    %v708 = vunpack.c.h.b16 %v659
    %v709 = vunpack.c.l.b16 %v660
    %v710 = vunpack.c.h.b16 %v660
    %v711 = vunpack.c.l.b16 %v661
    %v712 = vunpack.c.h.b16 %v661
    %v713 = vunpack.c.l.b16 %v662
    %v714 = vunpack.c.h.b16 %v662
    %v715 = vunpack.c.l.b16 %v663
    %v716 = vunpack.c.h.b16 %v663
    %v717 = vunpack.c.l.b16 %v664
    %v718 = vunpack.c.h.b16 %v664
    %v719 = vunpack.c.l.b16 %v665
    %v720 = vunpack.c.h.b16 %v665
    %v721 = vunpack.c.l.b16 %v666
    %v722 = vunpack.c.h.b16 %v666
    %v723 = vunpack.c.l.b16 %v667
    %v724 = vunpack.c.h.b16 %v667
    %v725 = vunpack.c.l.b16 %v668
    %v726 = vunpack.c.h.b16 %v668
    %v727 = vunpack.c.l.b16 %v669
    %v728 = vunpack.c.h.b16 %v669
    %v729 = vpack.c.b16 %v699, %v697
    %v730 = vpack.c.b16 %v700, %v698
    %v731 = vpack.c.b16 %v703, %v701
    %v732 = vpack.c.b16 %v704, %v702
    %v733 = vpack.c.b16 %v707, %v705
    %v734 = vpack.c.b16 %v708, %v706
    %v735 = vpack.c.b16 %v711, %v709
    %v736 = vpack.c.b16 %v712, %v710
    %v737 = vpack.c.b16 %v715, %v713
    %v738 = vpack.c.b16 %v716, %v714
    %v739 = vpack.c.b16 %v719, %v717
    %v740 = vpack.c.b16 %v720, %v718
    %v741 = vpack.c.b16 %v723, %v721
    %v742 = vpack.c.b16 %v724, %v722
    %v743 = vpack.c.b16 %v727, %v725
    %v744 = vpack.c.b16 %v728, %v726
    %761 = vmatprep.subr.bf16.mxu0 %v730
    %762 = vmatpush1.bf16.msra.mxu0 %v729
    %763 = vmatprep.subr.bf16.mxu0 %v732
    %764 = vmatpush1.bf16.msra.mxu0 %v731
    %765 = vmatprep.subr.bf16.mxu0 %v734
    %766 = vmatpush1.bf16.msra.mxu0 %v733
    %767 = vmatprep.subr.bf16.mxu0 %v736
    %768 = vmatpush1.bf16.msra.mxu0 %v735
    %769 = vmatprep.subr.bf16.mxu0 %v738
    %770 = vmatpush1.bf16.msra.mxu0 %v737
    %771 = vmatprep.subr.bf16.mxu0 %v740
    %772 = vmatpush1.bf16.msra.mxu0 %v739
    %773 = vmatprep.subr.bf16.mxu0 %v742
    %774 = vmatpush1.bf16.msra.mxu0 %v741
    %775 = vmatprep.subr.bf16.mxu0 %v744
    %776 = vmatpush1.bf16.msra.mxu0 %v743
    %777 = vmatprep.subr.bf16.mxu0 0
    %778 = vmatpush1.bf16.msra.mxu0 0
    %779 = vmatprep.subr.bf16.mxu0 0
    %780 = vmatpush1.bf16.msra.mxu0 0
    %781 = vmatprep.subr.bf16.mxu0 0
    %782 = vmatpush1.bf16.msra.mxu0 0
    %783 = vmatprep.subr.bf16.mxu0 0
    %784 = vmatpush1.bf16.msra.mxu0 0
    %785 = vmatprep.subr.bf16.mxu0 0
    %786 = vmatpush1.bf16.msra.mxu0 0
    %787 = vmatprep.subr.bf16.mxu0 0
    %788 = vmatpush1.bf16.msra.mxu0 0
    %789 = vmatprep.subr.bf16.mxu0 0
    %790 = vmatpush1.bf16.msra.mxu0 0
    %791 = vmatprep.subr.bf16.mxu0 0
    %792 = vmatpush1.bf16.msra.mxu0 0
    %793 = vmatprep.mubr.bf16.mxu0 0
    %794 = vmatmul.mubr.bf16.gmra.mrb[0].mxu0 %v622
    %v795 = vpop.f32.mrb[0].mxu0
    %v796 = vadd.f32 %v674, %v795
    %v797 = vpop.f32.mrb[0].mxu0
    %v798 = vadd.f32 %v678, %v797
    %v799 = vpop.f32.mrb[0].mxu0
    %v800 = vadd.f32 %v674, %v799
    %v801 = vpop.f32.mrb[0].mxu0
    %v802 = vadd.f32 %v678, %v801
    %803 = vmatprep.mubr.bf16.mxu0 0
    %804 = vmatmul.mubr.bf16.gmra.mrb[0].mxu0 %v623
    %v805 = vpop.f32.mrb[0].mxu0
    %v806 = vadd.f32 %v674, %v805
    %v807 = vpop.f32.mrb[0].mxu0
    %v808 = vadd.f32 %v678, %v807
    %v809 = vpop.f32.mrb[0].mxu0
    %v810 = vadd.f32 %v674, %v809
    %v811 = vpop.f32.mrb[0].mxu0
    %v812 = vadd.f32 %v678, %v811
    %813 = vmatprep.mubr.bf16.mxu0 0
    %814 = vmatmul.mubr.bf16.gmra.mrb[0].mxu0 %v624
    %v815 = vpop.f32.mrb[0].mxu0
    %v816 = vadd.f32 %v674, %v815
    %v817 = vpop.f32.mrb[0].mxu0
    %v818 = vadd.f32 %v678, %v817
    %v819 = vpop.f32.mrb[0].mxu0
    %v820 = vadd.f32 %v674, %v819
    %v821 = vpop.f32.mrb[0].mxu0
    %v822 = vadd.f32 %v678, %v821
    %823 = vmatprep.mubr.bf16.mxu0 0
    %824 = vmatmul.mubr.bf16.gmra.mrb[0].mxu0 %v625
    %v825 = vpop.f32.mrb[0].mxu0
    %v826 = vadd.f32 %v674, %v825
    %v827 = vpop.f32.mrb[0].mxu0
    %v828 = vadd.f32 %v678, %v827
    %v829 = vpop.f32.mrb[0].mxu0
    %v830 = vadd.f32 %v674, %v829
    %v831 = vpop.f32.mrb[0].mxu0
    %v832 = vadd.f32 %v678, %v831
    %833 = vmatprep.mubr.bf16.mxu0 0
    %834 = vmatmul.mubr.bf16.gmra.mrb[0].mxu0 %v626
    %v835 = vpop.f32.mrb[0].mxu0
    %v836 = vadd.f32 %v674, %v835
    %v837 = vpop.f32.mrb[0].mxu0
    %v838 = vadd.f32 %v678, %v837
    %v839 = vpop.f32.mrb[0].mxu0
    %v840 = vadd.f32 %v674, %v839
    %v841 = vpop.f32.mrb[0].mxu0
    %v842 = vadd.f32 %v678, %v841
    %843 = vmatprep.mubr.bf16.mxu0 0
    %844 = vmatmul.mubr.bf16.gmra.mrb[0].mxu0 %v627
    %v845 = vpop.f32.mrb[0].mxu0
    %v846 = vadd.f32 %v674, %v845
    %v847 = vpop.f32.mrb[0].mxu0
    %v848 = vadd.f32 %v678, %v847
    %v849 = vpop.f32.mrb[0].mxu0
    %v850 = vadd.f32 %v674, %v849
    %v851 = vpop.f32.mrb[0].mxu0
    %v852 = vadd.f32 %v678, %v851
    %853 = vmatprep.mubr.bf16.mxu0 0
    %854 = vmatmul.mubr.bf16.gmra.mrb[0].mxu0 %v628
    %v855 = vpop.f32.mrb[0].mxu0
    %v856 = vadd.f32 %v674, %v855
    %v857 = vpop.f32.mrb[0].mxu0
    %v858 = vadd.f32 %v678, %v857
    %v859 = vpop.f32.mrb[0].mxu0
    %v860 = vadd.f32 %v674, %v859
    %v861 = vpop.f32.mrb[0].mxu0
    %v862 = vadd.f32 %v678, %v861
    %863 = vmatprep.mubr.bf16.mxu0 0
    %864 = vmatmul.mubr.bf16.gmra.mrb[0].mxu0 %v629
    %v865 = vpop.f32.mrb[0].mxu0
    %v866 = vadd.f32 %v674, %v865
    %v867 = vpop.f32.mrb[0].mxu0
    %v868 = vadd.f32 %v678, %v867
    %v869 = vpop.f32.mrb[0].mxu0
    %v870 = vadd.f32 %v674, %v869
    %v871 = vpop.f32.mrb[0].mxu0
    %v872 = vadd.f32 %v678, %v871
    %873 = vmatprep.mubr.bf16.mxu0 0
    %874 = vmatmul.mubr.bf16.gmra.mrb[0].mxu0 %v630
    %v875 = vpop.f32.mrb[0].mxu0
    %v876 = vadd.f32 %v674, %v875
    %v877 = vpop.f32.mrb[0].mxu0
    %v878 = vadd.f32 %v678, %v877
    %v879 = vpop.f32.mrb[0].mxu0
    %v880 = vadd.f32 %v674, %v879
    %v881 = vpop.f32.mrb[0].mxu0
    %v882 = vadd.f32 %v678, %v881
    %883 = vmatprep.mubr.bf16.mxu0 0
    %884 = vmatmul.mubr.bf16.gmra.mrb[0].mxu0 %v631
    %v885 = vpop.f32.mrb[0].mxu0
    %v886 = vadd.f32 %v674, %v885
    %v887 = vpop.f32.mrb[0].mxu0
    %v888 = vadd.f32 %v678, %v887
    %v889 = vpop.f32.mrb[0].mxu0
    %v890 = vadd.f32 %v674, %v889
    %v891 = vpop.f32.mrb[0].mxu0
    %v892 = vadd.f32 %v678, %v891
    %893 = vmatprep.mubr.bf16.mxu0 0
    %894 = vmatmul.mubr.bf16.gmra.mrb[0].mxu0 %v632
    %v895 = vpop.f32.mrb[0].mxu0
    %v896 = vadd.f32 %v674, %v895
    %v897 = vpop.f32.mrb[0].mxu0
    %v898 = vadd.f32 %v678, %v897
    %v899 = vpop.f32.mrb[0].mxu0
    %v900 = vadd.f32 %v674, %v899
    %v901 = vpop.f32.mrb[0].mxu0
    %v902 = vadd.f32 %v678, %v901
    %903 = vmatprep.mubr.bf16.mxu0 0
    %904 = vmatmul.mubr.bf16.gmra.mrb[0].mxu0 %v633
    %v905 = vpop.f32.mrb[0].mxu0
    %v906 = vadd.f32 %v674, %v905
    %v907 = vpop.f32.mrb[0].mxu0
    %v908 = vadd.f32 %v678, %v907
    %v909 = vpop.f32.mrb[0].mxu0
    %v910 = vadd.f32 %v674, %v909
    %v911 = vpop.f32.mrb[0].mxu0
    %v912 = vadd.f32 %v678, %v911
    %913 = vmatprep.mubr.bf16.mxu0 0
    %914 = vmatmul.mubr.bf16.gmra.mrb[0].mxu0 %v634
    %v915 = vpop.f32.mrb[0].mxu0
    %v916 = vadd.f32 %v674, %v915
    %v917 = vpop.f32.mrb[0].mxu0
    %v918 = vadd.f32 %v678, %v917
    %v919 = vpop.f32.mrb[0].mxu0
    %v920 = vadd.f32 %v674, %v919
    %v921 = vpop.f32.mrb[0].mxu0
    %v922 = vadd.f32 %v678, %v921
    %923 = vmatprep.mubr.bf16.mxu0 0
    %924 = vmatmul.mubr.bf16.gmra.mrb[0].mxu0 %v635
    %v925 = vpop.f32.mrb[0].mxu0
    %v926 = vadd.f32 %v674, %v925
    %v927 = vpop.f32.mrb[0].mxu0
    %v928 = vadd.f32 %v678, %v927
    %v929 = vpop.f32.mrb[0].mxu0
    %v930 = vadd.f32 %v674, %v929
    %v931 = vpop.f32.mrb[0].mxu0
    %v932 = vadd.f32 %v678, %v931
    %933 = vmatprep.mubr.bf16.mxu0 0
    %934 = vmatmul.mubr.bf16.gmra.mrb[0].mxu0 %v636
    %v935 = vpop.f32.mrb[0].mxu0
    %v936 = vadd.f32 %v674, %v935
    %v937 = vpop.f32.mrb[0].mxu0
    %v938 = vadd.f32 %v678, %v937
    %v939 = vpop.f32.mrb[0].mxu0
    %v940 = vadd.f32 %v674, %v939
    %v941 = vpop.f32.mrb[0].mxu0
    %v942 = vadd.f32 %v678, %v941
    %943 = vmatprep.mubr.bf16.mxu0 0
    %944 = vmatmul.mubr.bf16.gmra.mrb[0].mxu0 %v637
    %v945 = vpop.f32.mrb[0].mxu0
    %v946 = vadd.f32 %v674, %v945
    %v947 = vpop.f32.mrb[0].mxu0
    %v948 = vadd.f32 %v678, %v947
    %v949 = vpop.f32.mrb[0].mxu0
    %v950 = vadd.f32 %v674, %v949
    %v951 = vpop.f32.mrb[0].mxu0
    %v952 = vadd.f32 %v678, %v951
    %953 = vmatprep.mubr.bf16.mxu0 0
    %954 = vmatmul.mubr.bf16.gmra.mrb[0].mxu0 %v638
    %v955 = vpop.f32.mrb[0].mxu0
    %v956 = vadd.f32 %v674, %v955
    %v957 = vpop.f32.mrb[0].mxu0
    %v958 = vadd.f32 %v678, %v957
    %v959 = vpop.f32.mrb[0].mxu0
    %v960 = vadd.f32 %v674, %v959
    %v961 = vpop.f32.mrb[0].mxu0
    %v962 = vadd.f32 %v678, %v961
    %963 = vmatprep.mubr.bf16.mxu0 0
    %964 = vmatmul.mubr.bf16.gmra.mrb[0].mxu0 %v639
    %v965 = vpop.f32.mrb[0].mxu0
    %v966 = vadd.f32 %v674, %v965
    %v967 = vpop.f32.mrb[0].mxu0
    %v968 = vadd.f32 %v678, %v967
    %v969 = vpop.f32.mrb[0].mxu0
    %v970 = vadd.f32 %v674, %v969
    %v971 = vpop.f32.mrb[0].mxu0
    %v972 = vadd.f32 %v678, %v971
    %973 = vmatprep.mubr.bf16.mxu0 0
    %974 = vmatmul.mubr.bf16.gmra.mrb[0].mxu0 %v640
    %v975 = vpop.f32.mrb[0].mxu0
    %v976 = vadd.f32 %v674, %v975
    %v977 = vpop.f32.mrb[0].mxu0
    %v978 = vadd.f32 %v678, %v977
    %v979 = vpop.f32.mrb[0].mxu0
    %v980 = vadd.f32 %v674, %v979
    %v981 = vpop.f32.mrb[0].mxu0
    %v982 = vadd.f32 %v678, %v981
    %983 = vmatprep.mubr.bf16.mxu0 0
    %984 = vmatmul.mubr.bf16.gmra.mrb[0].mxu0 %v641
    %v985 = vpop.f32.mrb[0].mxu0
    %v986 = vadd.f32 %v674, %v985
    %v987 = vpop.f32.mrb[0].mxu0
    %v988 = vadd.f32 %v678, %v987
    %v989 = vpop.f32.mrb[0].mxu0
    %v990 = vadd.f32 %v674, %v989
    %v991 = vpop.f32.mrb[0].mxu0
    %v992 = vadd.f32 %v678, %v991
    %993 = vmatprep.mubr.bf16.mxu0 0
    %994 = vmatmul.mubr.bf16.gmra.mrb[0].mxu0 %v642
    %v995 = vpop.f32.mrb[0].mxu0
    %v996 = vadd.f32 %v674, %v995
    %v997 = vpop.f32.mrb[0].mxu0
    %v998 = vadd.f32 %v678, %v997
    %v999 = vpop.f32.mrb[0].mxu0
    %v1000 = vadd.f32 %v674, %v999
    %v1001 = vpop.f32.mrb[0].mxu0
    %v1002 = vadd.f32 %v678, %v1001
    %1003 = vmatprep.mubr.bf16.mxu0 0
    %1004 = vmatmul.mubr.bf16.gmra.mrb[0].mxu0 %v643
    %v1005 = vpop.f32.mrb[0].mxu0
    %v1006 = vadd.f32 %v674, %v1005
    %v1007 = vpop.f32.mrb[0].mxu0
    %v1008 = vadd.f32 %v678, %v1007
    %v1009 = vpop.f32.mrb[0].mxu0
    %v1010 = vadd.f32 %v674, %v1009
    %v1011 = vpop.f32.mrb[0].mxu0
    %v1012 = vadd.f32 %v678, %v1011
    %1013 = vmatprep.mubr.bf16.mxu0 0
    %1014 = vmatmul.mubr.bf16.gmra.mrb[0].mxu0 %v644
    %v1015 = vpop.f32.mrb[0].mxu0
    %v1016 = vadd.f32 %v674, %v1015
    %v1017 = vpop.f32.mrb[0].mxu0
    %v1018 = vadd.f32 %v678, %v1017
    %v1019 = vpop.f32.mrb[0].mxu0
    %v1020 = vadd.f32 %v674, %v1019
    %v1021 = vpop.f32.mrb[0].mxu0
    %v1022 = vadd.f32 %v678, %v1021
    %1023 = vmatprep.mubr.bf16.mxu0 0
    %1024 = vmatmul.mubr.bf16.gmra.mrb[0].mxu0 %v645
    %v1025 = vpop.f32.mrb[0].mxu0
    %v1026 = vadd.f32 %v674, %v1025
    %v1027 = vpop.f32.mrb[0].mxu0
    %v1028 = vadd.f32 %v678, %v1027
    %v1029 = vpop.f32.mrb[0].mxu0
    %v1030 = vadd.f32 %v674, %v1029
    %v1031 = vpop.f32.mrb[0].mxu0
    %v1032 = vadd.f32 %v678, %v1031
    %1033 = vmatprep.mubr.bf16.mxu0 0
    %1034 = vmatmul.mubr.bf16.gmra.mrb[0].mxu0 %v646
    %v1035 = vpop.f32.mrb[0].mxu0
    %v1036 = vadd.f32 %v674, %v1035
    %v1037 = vpop.f32.mrb[0].mxu0
    %v1038 = vadd.f32 %v678, %v1037
    %v1039 = vpop.f32.mrb[0].mxu0
    %v1040 = vadd.f32 %v674, %v1039
    %v1041 = vpop.f32.mrb[0].mxu0
    %v1042 = vadd.f32 %v678, %v1041
    %1043 = vmatprep.mubr.bf16.mxu0 0
    %1044 = vmatmul.mubr.bf16.gmra.mrb[0].mxu0 %v647
    %v1045 = vpop.f32.mrb[0].mxu0
    %v1046 = vadd.f32 %v674, %v1045
    %v1047 = vpop.f32.mrb[0].mxu0
    %v1048 = vadd.f32 %v678, %v1047
    %v1049 = vpop.f32.mrb[0].mxu0
    %v1050 = vadd.f32 %v674, %v1049
    %v1051 = vpop.f32.mrb[0].mxu0
    %v1052 = vadd.f32 %v678, %v1051
    %1053 = vmatprep.mubr.bf16.mxu0 0
    %1054 = vmatmul.mubr.bf16.gmra.mrb[0].mxu0 %v648
    %v1055 = vpop.f32.mrb[0].mxu0
    %v1056 = vadd.f32 %v674, %v1055
    %v1057 = vpop.f32.mrb[0].mxu0
    %v1058 = vadd.f32 %v678, %v1057
    %v1059 = vpop.f32.mrb[0].mxu0
    %v1060 = vadd.f32 %v674, %v1059
    %v1061 = vpop.f32.mrb[0].mxu0
    %v1062 = vadd.f32 %v678, %v1061
    %1063 = vmatprep.mubr.bf16.mxu0 0
    %1064 = vmatmul.mubr.bf16.gmra.mrb[0].mxu0 %v649
    %v1065 = vpop.f32.mrb[0].mxu0
    %v1066 = vadd.f32 %v674, %v1065
    %v1067 = vpop.f32.mrb[0].mxu0
    %v1068 = vadd.f32 %v678, %v1067
    %v1069 = vpop.f32.mrb[0].mxu0
    %v1070 = vadd.f32 %v674, %v1069
    %v1071 = vpop.f32.mrb[0].mxu0
    %v1072 = vadd.f32 %v678, %v1071
    %1073 = vmatprep.mubr.bf16.mxu0 0
    %1074 = vmatmul.mubr.bf16.gmra.mrb[0].mxu0 %v650
    %v1075 = vpop.f32.mrb[0].mxu0
    %v1076 = vadd.f32 %v674, %v1075
    %v1077 = vpop.f32.mrb[0].mxu0
    %v1078 = vadd.f32 %v678, %v1077
    %v1079 = vpop.f32.mrb[0].mxu0
    %v1080 = vadd.f32 %v674, %v1079
    %v1081 = vpop.f32.mrb[0].mxu0
    %v1082 = vadd.f32 %v678, %v1081
    %1083 = vmatprep.mubr.bf16.mxu0 0
    %1084 = vmatmul.mubr.bf16.gmra.mrb[0].mxu0 %v651
    %v1085 = vpop.f32.mrb[0].mxu0
    %v1086 = vadd.f32 %v674, %v1085
    %v1087 = vpop.f32.mrb[0].mxu0
    %v1088 = vadd.f32 %v678, %v1087
    %v1089 = vpop.f32.mrb[0].mxu0
    %v1090 = vadd.f32 %v674, %v1089
    %v1091 = vpop.f32.mrb[0].mxu0
    %v1092 = vadd.f32 %v678, %v1091
    %1093 = vmatprep.mubr.bf16.mxu0 0
    %1094 = vmatmul.mubr.bf16.gmra.mrb[0].mxu0 %v652
    %v1095 = vpop.f32.mrb[0].mxu0
    %v1096 = vadd.f32 %v674, %v1095
    %v1097 = vpop.f32.mrb[0].mxu0
    %v1098 = vadd.f32 %v678, %v1097
    %v1099 = vpop.f32.mrb[0].mxu0
    %v1100 = vadd.f32 %v674, %v1099
    %v1101 = vpop.f32.mrb[0].mxu0
    %v1102 = vadd.f32 %v678, %v1101
    %1103 = vmatprep.mubr.bf16.mxu0 0
    %1104 = vmatmul.mubr.bf16.gmra.mrb[0].mxu0 %v653
    %v1105 = vpop.f32.mrb[0].mxu0
    %v1106 = vadd.f32 %v674, %v1105
    %v1107 = vpop.f32.mrb[0].mxu0
    %v1108 = vadd.f32 %v678, %v1107
    %v1109 = vpop.f32.mrb[0].mxu0
    %v1110 = vadd.f32 %v674, %v1109
    %v1111 = vpop.f32.mrb[0].mxu0
    %v1112 = vadd.f32 %v678, %v1111
    %1113 = vdwg.mxu0
    %v1114 = vmul.f32 %v796, 0.01
    %v1115 = vmul.f32 %v798, 0.01
    %v1116 = vmul.f32 %v800, 0.01
    %v1117 = vmul.f32 %v802, 0.01
    %v1118 = vmul.f32 %v806, 0.01
    %v1119 = vmul.f32 %v808, 0.01
    %v1120 = vmul.f32 %v810, 0.01
    %v1121 = vmul.f32 %v812, 0.01
    %v1122 = vmul.f32 %v816, 0.01
    %v1123 = vmul.f32 %v818, 0.01
    %v1124 = vmul.f32 %v820, 0.01
    %v1125 = vmul.f32 %v822, 0.01
    %v1126 = vmul.f32 %v826, 0.01
    %v1127 = vmul.f32 %v828, 0.01
    %v1128 = vmul.f32 %v830, 0.01
    %v1129 = vmul.f32 %v832, 0.01
    %v1130 = vmul.f32 %v836, 0.01
    %v1131 = vmul.f32 %v838, 0.01
    %v1132 = vmul.f32 %v840, 0.01
    %v1133 = vmul.f32 %v842, 0.01
    %v1134 = vmul.f32 %v846, 0.01
    %v1135 = vmul.f32 %v848, 0.01
    %v1136 = vmul.f32 %v850, 0.01
    %v1137 = vmul.f32 %v852, 0.01
    %v1138 = vmul.f32 %v856, 0.01
    %v1139 = vmul.f32 %v858, 0.01
    %v1140 = vmul.f32 %v860, 0.01
    %v1141 = vmul.f32 %v862, 0.01
    %v1142 = vmul.f32 %v866, 0.01
    %v1143 = vmul.f32 %v868, 0.01
    %v1144 = vmul.f32 %v870, 0.01
    %v1145 = vmul.f32 %v872, 0.01
    %v1146 = vmul.f32 %v876, 0.01
    %v1147 = vmul.f32 %v878, 0.01
    %v1148 = vmul.f32 %v880, 0.01
    %v1149 = vmul.f32 %v882, 0.01
    %v1150 = vmul.f32 %v886, 0.01
    %v1151 = vmul.f32 %v888, 0.01
    %v1152 = vmul.f32 %v890, 0.01
    %v1153 = vmul.f32 %v892, 0.01
    %v1154 = vmul.f32 %v896, 0.01
    %v1155 = vmul.f32 %v898, 0.01
    %v1156 = vmul.f32 %v900, 0.01
    %v1157 = vmul.f32 %v902, 0.01
    %v1158 = vmul.f32 %v906, 0.01
    %v1159 = vmul.f32 %v908, 0.01
    %v1160 = vmul.f32 %v910, 0.01
    %v1161 = vmul.f32 %v912, 0.01
    %v1162 = vmul.f32 %v916, 0.01
    %v1163 = vmul.f32 %v918, 0.01
    %v1164 = vmul.f32 %v920, 0.01
    %v1165 = vmul.f32 %v922, 0.01
    %v1166 = vmul.f32 %v926, 0.01
    %v1167 = vmul.f32 %v928, 0.01
    %v1168 = vmul.f32 %v930, 0.01
    %v1169 = vmul.f32 %v932, 0.01
    %v1170 = vmul.f32 %v936, 0.01
    %v1171 = vmul.f32 %v938, 0.01
    %v1172 = vmul.f32 %v940, 0.01
    %v1173 = vmul.f32 %v942, 0.01
    %v1174 = vmul.f32 %v946, 0.01
    %v1175 = vmul.f32 %v948, 0.01
    %v1176 = vmul.f32 %v950, 0.01
    %v1177 = vmul.f32 %v952, 0.01
    %v1178 = vmul.f32 %v956, 0.01
    %v1179 = vmul.f32 %v958, 0.01
    %v1180 = vmul.f32 %v960, 0.01
    %v1181 = vmul.f32 %v962, 0.01
    %v1182 = vmul.f32 %v966, 0.01
    %v1183 = vmul.f32 %v968, 0.01
    %v1184 = vmul.f32 %v970, 0.01
    %v1185 = vmul.f32 %v972, 0.01
    %v1186 = vmul.f32 %v976, 0.01
    %v1187 = vmul.f32 %v978, 0.01
    %v1188 = vmul.f32 %v980, 0.01
    %v1189 = vmul.f32 %v982, 0.01
    %v1190 = vmul.f32 %v986, 0.01
    %v1191 = vmul.f32 %v988, 0.01
    %v1192 = vmul.f32 %v990, 0.01
    %v1193 = vmul.f32 %v992, 0.01
    %v1194 = vmul.f32 %v996, 0.01
    %v1195 = vmul.f32 %v998, 0.01
    %v1196 = vmul.f32 %v1000, 0.01
    %v1197 = vmul.f32 %v1002, 0.01
    %v1198 = vmul.f32 %v1006, 0.01
    %v1199 = vmul.f32 %v1008, 0.01
    %v1200 = vmul.f32 %v1010, 0.01
    %v1201 = vmul.f32 %v1012, 0.01
    %v1202 = vmul.f32 %v1016, 0.01
    %v1203 = vmul.f32 %v1018, 0.01
    %v1204 = vmul.f32 %v1020, 0.01
    %v1205 = vmul.f32 %v1022, 0.01
    %v1206 = vmul.f32 %v1026, 0.01
    %v1207 = vmul.f32 %v1028, 0.01
    %v1208 = vmul.f32 %v1030, 0.01
    %v1209 = vmul.f32 %v1032, 0.01
    %v1210 = vmul.f32 %v1036, 0.01
    %v1211 = vmul.f32 %v1038, 0.01
    %v1212 = vmul.f32 %v1040, 0.01
    %v1213 = vmul.f32 %v1042, 0.01
    %v1214 = vmul.f32 %v1046, 0.01
    %v1215 = vmul.f32 %v1048, 0.01
    %v1216 = vmul.f32 %v1050, 0.01
    %v1217 = vmul.f32 %v1052, 0.01
    %v1218 = vmul.f32 %v1056, 0.01
    %v1219 = vmul.f32 %v1058, 0.01
    %v1220 = vmul.f32 %v1060, 0.01
    %v1221 = vmul.f32 %v1062, 0.01
    %v1222 = vmul.f32 %v1066, 0.01
    %v1223 = vmul.f32 %v1068, 0.01
    %v1224 = vmul.f32 %v1070, 0.01
    %v1225 = vmul.f32 %v1072, 0.01
    %v1226 = vmul.f32 %v1076, 0.01
    %v1227 = vmul.f32 %v1078, 0.01
    %v1228 = vmul.f32 %v1080, 0.01
    %v1229 = vmul.f32 %v1082, 0.01
    %v1230 = vmul.f32 %v1086, 0.01
    %v1231 = vmul.f32 %v1088, 0.01
    %v1232 = vmul.f32 %v1090, 0.01
    %v1233 = vmul.f32 %v1092, 0.01
    %v1234 = vmul.f32 %v1096, 0.01
    %v1235 = vmul.f32 %v1098, 0.01
    %v1236 = vmul.f32 %v1100, 0.01
    %v1237 = vmul.f32 %v1102, 0.01
    %v1238 = vmul.f32 %v1106, 0.01
    %v1239 = vmul.f32 %v1108, 0.01
    %v1240 = vmul.f32 %v1110, 0.01
    %v1241 = vmul.f32 %v1112, 0.01
    %v1242 = vmax.f32 %v796, %v1114
    %v1243 = vmax.f32 %v798, %v1115
    %v1244 = vmax.f32 %v800, %v1116
    %v1245 = vmax.f32 %v802, %v1117
    %v1246 = vmax.f32 %v806, %v1118
    %v1247 = vmax.f32 %v808, %v1119
    %v1248 = vmax.f32 %v810, %v1120
    %v1249 = vmax.f32 %v812, %v1121
    %v1250 = vmax.f32 %v816, %v1122
    %v1251 = vmax.f32 %v818, %v1123
    %v1252 = vmax.f32 %v820, %v1124
    %v1253 = vmax.f32 %v822, %v1125
    %v1254 = vmax.f32 %v826, %v1126
    %v1255 = vmax.f32 %v828, %v1127
    %v1256 = vmax.f32 %v830, %v1128
    %v1257 = vmax.f32 %v832, %v1129
    %v1258 = vmax.f32 %v836, %v1130
    %v1259 = vmax.f32 %v838, %v1131
    %v1260 = vmax.f32 %v840, %v1132
    %v1261 = vmax.f32 %v842, %v1133
    %v1262 = vmax.f32 %v846, %v1134
    %v1263 = vmax.f32 %v848, %v1135
    %v1264 = vmax.f32 %v850, %v1136
    %v1265 = vmax.f32 %v852, %v1137
    %v1266 = vmax.f32 %v856, %v1138
    %v1267 = vmax.f32 %v858, %v1139
    %v1268 = vmax.f32 %v860, %v1140
    %v1269 = vmax.f32 %v862, %v1141
    %v1270 = vmax.f32 %v866, %v1142
    %v1271 = vmax.f32 %v868, %v1143
    %v1272 = vmax.f32 %v870, %v1144
    %v1273 = vmax.f32 %v872, %v1145
    %v1274 = vmax.f32 %v876, %v1146
    %v1275 = vmax.f32 %v878, %v1147
    %v1276 = vmax.f32 %v880, %v1148
    %v1277 = vmax.f32 %v882, %v1149
    %v1278 = vmax.f32 %v886, %v1150
    %v1279 = vmax.f32 %v888, %v1151
    %v1280 = vmax.f32 %v890, %v1152
    %v1281 = vmax.f32 %v892, %v1153
    %v1282 = vmax.f32 %v896, %v1154
    %v1283 = vmax.f32 %v898, %v1155
    %v1284 = vmax.f32 %v900, %v1156
    %v1285 = vmax.f32 %v902, %v1157
    %v1286 = vmax.f32 %v906, %v1158
    %v1287 = vmax.f32 %v908, %v1159
    %v1288 = vmax.f32 %v910, %v1160
    %v1289 = vmax.f32 %v912, %v1161
    %v1290 = vmax.f32 %v916, %v1162
    %v1291 = vmax.f32 %v918, %v1163
    %v1292 = vmax.f32 %v920, %v1164
    %v1293 = vmax.f32 %v922, %v1165
    %v1294 = vmax.f32 %v926, %v1166
    %v1295 = vmax.f32 %v928, %v1167
    %v1296 = vmax.f32 %v930, %v1168
    %v1297 = vmax.f32 %v932, %v1169
    %v1298 = vmax.f32 %v936, %v1170
    %v1299 = vmax.f32 %v938, %v1171
    %v1300 = vmax.f32 %v940, %v1172
    %v1301 = vmax.f32 %v942, %v1173
    %v1302 = vmax.f32 %v946, %v1174
    %v1303 = vmax.f32 %v948, %v1175
    %v1304 = vmax.f32 %v950, %v1176
    %v1305 = vmax.f32 %v952, %v1177
    %v1306 = vmax.f32 %v956, %v1178
    %v1307 = vmax.f32 %v958, %v1179
    %v1308 = vmax.f32 %v960, %v1180
    %v1309 = vmax.f32 %v962, %v1181
    %v1310 = vmax.f32 %v966, %v1182
    %v1311 = vmax.f32 %v968, %v1183
    %v1312 = vmax.f32 %v970, %v1184
    %v1313 = vmax.f32 %v972, %v1185
    %v1314 = vmax.f32 %v976, %v1186
    %v1315 = vmax.f32 %v978, %v1187
    %v1316 = vmax.f32 %v980, %v1188
    %v1317 = vmax.f32 %v982, %v1189
    %v1318 = vmax.f32 %v986, %v1190
    %v1319 = vmax.f32 %v988, %v1191
    %v1320 = vmax.f32 %v990, %v1192
    %v1321 = vmax.f32 %v992, %v1193
    %v1322 = vmax.f32 %v996, %v1194
    %v1323 = vmax.f32 %v998, %v1195
    %v1324 = vmax.f32 %v1000, %v1196
    %v1325 = vmax.f32 %v1002, %v1197
    %v1326 = vmax.f32 %v1006, %v1198
    %v1327 = vmax.f32 %v1008, %v1199
    %v1328 = vmax.f32 %v1010, %v1200
    %v1329 = vmax.f32 %v1012, %v1201
    %v1330 = vmax.f32 %v1016, %v1202
    %v1331 = vmax.f32 %v1018, %v1203
    %v1332 = vmax.f32 %v1020, %v1204
    %v1333 = vmax.f32 %v1022, %v1205
    %v1334 = vmax.f32 %v1026, %v1206
    %v1335 = vmax.f32 %v1028, %v1207
    %v1336 = vmax.f32 %v1030, %v1208
    %v1337 = vmax.f32 %v1032, %v1209
    %v1338 = vmax.f32 %v1036, %v1210
    %v1339 = vmax.f32 %v1038, %v1211
    %v1340 = vmax.f32 %v1040, %v1212
    %v1341 = vmax.f32 %v1042, %v1213
    %v1342 = vmax.f32 %v1046, %v1214
    %v1343 = vmax.f32 %v1048, %v1215
    %v1344 = vmax.f32 %v1050, %v1216
    %v1345 = vmax.f32 %v1052, %v1217
    %v1346 = vmax.f32 %v1056, %v1218
    %v1347 = vmax.f32 %v1058, %v1219
    %v1348 = vmax.f32 %v1060, %v1220
    %v1349 = vmax.f32 %v1062, %v1221
    %v1350 = vmax.f32 %v1066, %v1222
    %v1351 = vmax.f32 %v1068, %v1223
    %v1352 = vmax.f32 %v1070, %v1224
    %v1353 = vmax.f32 %v1072, %v1225
    %v1354 = vmax.f32 %v1076, %v1226
    %v1355 = vmax.f32 %v1078, %v1227
    %v1356 = vmax.f32 %v1080, %v1228
    %v1357 = vmax.f32 %v1082, %v1229
    %v1358 = vmax.f32 %v1086, %v1230
    %v1359 = vmax.f32 %v1088, %v1231
    %v1360 = vmax.f32 %v1090, %v1232
    %v1361 = vmax.f32 %v1092, %v1233
    %v1362 = vmax.f32 %v1096, %v1234
    %v1363 = vmax.f32 %v1098, %v1235
    %v1364 = vmax.f32 %v1100, %v1236
    %v1365 = vmax.f32 %v1102, %v1237
    %v1366 = vmax.f32 %v1106, %v1238
    %v1367 = vmax.f32 %v1108, %v1239
    %v1368 = vmax.f32 %v1110, %v1240
    %v1369 = vmax.f32 %v1112, %v1241
    %v1370 = vpack.c.bf16 %v1244, %v1242
    %v1371 = vpack.c.bf16 %v1245, %v1243
    %v1372 = vpack.c.bf16 %v1248, %v1246
    %v1373 = vpack.c.bf16 %v1249, %v1247
    %v1374 = vpack.c.bf16 %v1252, %v1250
    %v1375 = vpack.c.bf16 %v1253, %v1251
    %v1376 = vpack.c.bf16 %v1256, %v1254
    %v1377 = vpack.c.bf16 %v1257, %v1255
    %v1378 = vpack.c.bf16 %v1260, %v1258
    %v1379 = vpack.c.bf16 %v1261, %v1259
    %v1380 = vpack.c.bf16 %v1264, %v1262
    %v1381 = vpack.c.bf16 %v1265, %v1263
    %v1382 = vpack.c.bf16 %v1268, %v1266
    %v1383 = vpack.c.bf16 %v1269, %v1267
    %v1384 = vpack.c.bf16 %v1272, %v1270
    %v1385 = vpack.c.bf16 %v1273, %v1271
    %v1386 = vpack.c.bf16 %v1276, %v1274
    %v1387 = vpack.c.bf16 %v1277, %v1275
    %v1388 = vpack.c.bf16 %v1280, %v1278
    %v1389 = vpack.c.bf16 %v1281, %v1279
    %v1390 = vpack.c.bf16 %v1284, %v1282
    %v1391 = vpack.c.bf16 %v1285, %v1283
    %v1392 = vpack.c.bf16 %v1288, %v1286
    %v1393 = vpack.c.bf16 %v1289, %v1287
    %v1394 = vpack.c.bf16 %v1292, %v1290
    %v1395 = vpack.c.bf16 %v1293, %v1291
    %v1396 = vpack.c.bf16 %v1296, %v1294
    %v1397 = vpack.c.bf16 %v1297, %v1295
    %v1398 = vpack.c.bf16 %v1300, %v1298
    %v1399 = vpack.c.bf16 %v1301, %v1299
    %v1400 = vpack.c.bf16 %v1304, %v1302
    %v1401 = vpack.c.bf16 %v1305, %v1303
    %v1402 = vpack.c.bf16 %v1308, %v1306
    %v1403 = vpack.c.bf16 %v1309, %v1307
    %v1404 = vpack.c.bf16 %v1312, %v1310
    %v1405 = vpack.c.bf16 %v1313, %v1311
    %v1406 = vpack.c.bf16 %v1316, %v1314
    %v1407 = vpack.c.bf16 %v1317, %v1315
    %v1408 = vpack.c.bf16 %v1320, %v1318
    %v1409 = vpack.c.bf16 %v1321, %v1319
    %v1410 = vpack.c.bf16 %v1324, %v1322
    %v1411 = vpack.c.bf16 %v1325, %v1323
    %v1412 = vpack.c.bf16 %v1328, %v1326
    %v1413 = vpack.c.bf16 %v1329, %v1327
    %v1414 = vpack.c.bf16 %v1332, %v1330
    %v1415 = vpack.c.bf16 %v1333, %v1331
    %v1416 = vpack.c.bf16 %v1336, %v1334
    %v1417 = vpack.c.bf16 %v1337, %v1335
    %v1418 = vpack.c.bf16 %v1340, %v1338
    %v1419 = vpack.c.bf16 %v1341, %v1339
    %v1420 = vpack.c.bf16 %v1344, %v1342
    %v1421 = vpack.c.bf16 %v1345, %v1343
    %v1422 = vpack.c.bf16 %v1348, %v1346
    %v1423 = vpack.c.bf16 %v1349, %v1347
    %v1424 = vpack.c.bf16 %v1352, %v1350
    %v1425 = vpack.c.bf16 %v1353, %v1351
    %v1426 = vpack.c.bf16 %v1356, %v1354
    %v1427 = vpack.c.bf16 %v1357, %v1355
    %v1428 = vpack.c.bf16 %v1360, %v1358
    %v1429 = vpack.c.bf16 %v1361, %v1359
    %v1430 = vpack.c.bf16 %v1364, %v1362
    %v1431 = vpack.c.bf16 %v1365, %v1363
    %v1432 = vpack.c.bf16 %v1368, %v1366
    %v1433 = vpack.c.bf16 %v1369, %v1367
    %v1434 = vld [vmem:[%s5] sm:$0xf]
    %v1435 = vld [vmem:[%s5 + $0x4] sm:$0xf]
    %v1436 = vld [vmem:[%s5 + $0x8] sm:$0xf]
    %v1437 = vld [vmem:[%s5 + $0xc] sm:$0xf]
    %v1438 = vld [vmem:[%s5 + $0x10] sm:$0xf]
    %v1439 = vld [vmem:[%s5 + $0x14] sm:$0xf]
    %v1440 = vld [vmem:[%s5 + $0x18] sm:$0xf]
    %v1441 = vld [vmem:[%s5 + $0x1c] sm:$0xf]
    %v1442 = vld [vmem:[%s5 + $0x20] sm:$0xf]
    %v1443 = vld [vmem:[%s5 + $0x24] sm:$0xf]
    %v1444 = vld [vmem:[%s5 + $0x28] sm:$0xf]
    %v1445 = vld [vmem:[%s5 + $0x2c] sm:$0xf]
    %v1446 = vld [vmem:[%s5 + $0x30] sm:$0xf]
    %v1447 = vld [vmem:[%s5 + $0x34] sm:$0xf]
    %v1448 = vld [vmem:[%s5 + $0x38] sm:$0xf]
    %v1449 = vld [vmem:[%s5 + $0x3c] sm:$0xf]
    %v1450 = vld [vmem:[%s5 + $0x40] sm:$0xf]
    %v1451 = vld [vmem:[%s5 + $0x44] sm:$0xf]
    %v1452 = vld [vmem:[%s5 + $0x48] sm:$0xf]
    %v1453 = vld [vmem:[%s5 + $0x4c] sm:$0xf]
    %v1454 = vld [vmem:[%s5 + $0x50] sm:$0xf]
    %v1455 = vld [vmem:[%s5 + $0x54] sm:$0xf]
    %v1456 = vld [vmem:[%s5 + $0x58] sm:$0xf]
    %v1457 = vld [vmem:[%s5 + $0x5c] sm:$0xf]
    %v1458 = vld [vmem:[%s5 + $0x60] sm:$0xf]
    %v1459 = vld [vmem:[%s5 + $0x64] sm:$0xf]
    %v1460 = vld [vmem:[%s5 + $0x68] sm:$0xf]
    %v1461 = vld [vmem:[%s5 + $0x6c] sm:$0xf]
    %v1462 = vld [vmem:[%s5 + $0x70] sm:$0xf]
    %v1463 = vld [vmem:[%s5 + $0x74] sm:$0xf]
    %v1464 = vld [vmem:[%s5 + $0x78] sm:$0xf]
    %v1465 = vld [vmem:[%s5 + $0x7c] sm:$0xf]
    %v1467 = vlaneseq
    %v1468 = vshrl.u32 %v1467, 7
    %v1469 = vsub.s32 0, %v1468
    %v1470 = vrot.slane %v132, %v1469
    %v1504 = vunpack.c.l.b16 %v1434
    %v1505 = vunpack.c.l.b16 %v1435
    %v1506 = vunpack.c.l.b16 %v1436
    %v1507 = vunpack.c.l.b16 %v1437
    %v1508 = vunpack.c.l.b16 %v1438
    %v1509 = vunpack.c.l.b16 %v1439
    %v1510 = vunpack.c.l.b16 %v1440
    %v1511 = vunpack.c.l.b16 %v1441
    %v1512 = vunpack.c.l.b16 %v1442
    %v1513 = vunpack.c.l.b16 %v1443
    %v1514 = vunpack.c.l.b16 %v1444
    %v1515 = vunpack.c.l.b16 %v1445
    %v1516 = vunpack.c.l.b16 %v1446
    %v1517 = vunpack.c.l.b16 %v1447
    %v1518 = vunpack.c.l.b16 %v1448
    %v1519 = vunpack.c.l.b16 %v1449
    %v1520 = vunpack.c.l.b16 %v1450
    %v1521 = vunpack.c.l.b16 %v1451
    %v1522 = vunpack.c.l.b16 %v1452
    %v1523 = vunpack.c.l.b16 %v1453
    %v1524 = vunpack.c.l.b16 %v1454
    %v1525 = vunpack.c.l.b16 %v1455
    %v1526 = vunpack.c.l.b16 %v1456
    %v1527 = vunpack.c.l.b16 %v1457
    %v1528 = vunpack.c.l.b16 %v1458
    %v1529 = vunpack.c.l.b16 %v1459
    %v1530 = vunpack.c.l.b16 %v1460
    %v1531 = vunpack.c.l.b16 %v1461
    %v1532 = vunpack.c.l.b16 %v1462
    %v1533 = vunpack.c.l.b16 %v1463
    %v1534 = vunpack.c.l.b16 %v1464
    %v1535 = vunpack.c.l.b16 %v1465
    %v1536 = vpack.c.b16 %v1505, %v1504
    %v1537 = vpack.c.b16 %v1507, %v1506
    %v1538 = vpack.c.b16 %v1509, %v1508
    %v1539 = vpack.c.b16 %v1511, %v1510
    %v1540 = vpack.c.b16 %v1513, %v1512
    %v1541 = vpack.c.b16 %v1515, %v1514
    %v1542 = vpack.c.b16 %v1517, %v1516
    %v1543 = vpack.c.b16 %v1519, %v1518
    %v1544 = vpack.c.b16 %v1521, %v1520
    %v1545 = vpack.c.b16 %v1523, %v1522
    %v1546 = vpack.c.b16 %v1525, %v1524
    %v1547 = vpack.c.b16 %v1527, %v1526
    %v1548 = vpack.c.b16 %v1529, %v1528
    %v1549 = vpack.c.b16 %v1531, %v1530
    %v1550 = vpack.c.b16 %v1533, %v1532
    %v1551 = vpack.c.b16 %v1535, %v1534
    %1568 = vmatprep.subr.bf16.mxu0 0
    %1569 = vmatpush1.bf16.msra.mxu0 %v1536
    %1570 = vmatprep.subr.bf16.mxu0 0
    %1571 = vmatpush1.bf16.msra.mxu0 %v1537
    %1572 = vmatprep.subr.bf16.mxu0 0
    %1573 = vmatpush1.bf16.msra.mxu0 %v1538
    %1574 = vmatprep.subr.bf16.mxu0 0
    %1575 = vmatpush1.bf16.msra.mxu0 %v1539
    %1576 = vmatprep.subr.bf16.mxu0 0
    %1577 = vmatpush1.bf16.msra.mxu0 %v1540
    %1578 = vmatprep.subr.bf16.mxu0 0
    %1579 = vmatpush1.bf16.msra.mxu0 %v1541
    %1580 = vmatprep.subr.bf16.mxu0 0
    %1581 = vmatpush1.bf16.msra.mxu0 %v1542
    %1582 = vmatprep.subr.bf16.mxu0 0
    %1583 = vmatpush1.bf16.msra.mxu0 %v1543
    %1584 = vmatprep.subr.bf16.mxu0 0
    %1585 = vmatpush1.bf16.msra.mxu0 %v1544
    %1586 = vmatprep.subr.bf16.mxu0 0
    %1587 = vmatpush1.bf16.msra.mxu0 %v1545
    %1588 = vmatprep.subr.bf16.mxu0 0
    %1589 = vmatpush1.bf16.msra.mxu0 %v1546
    %1590 = vmatprep.subr.bf16.mxu0 0
    %1591 = vmatpush1.bf16.msra.mxu0 %v1547
    %1592 = vmatprep.subr.bf16.mxu0 0
    %1593 = vmatpush1.bf16.msra.mxu0 %v1548
    %1594 = vmatprep.subr.bf16.mxu0 0
    %1595 = vmatpush1.bf16.msra.mxu0 %v1549
    %1596 = vmatprep.subr.bf16.mxu0 0
    %1597 = vmatpush1.bf16.msra.mxu0 %v1550
    %1598 = vmatprep.subr.bf16.mxu0 0
    %1599 = vmatpush1.bf16.msra.mxu0 %v1551
    %1600 = vmatprep.mubr.bf16.mxu0 %v1371
    %1601 = vmatmul.mubr.bf16.gmra.mrb[0].mxu0 %v1370
    %v1602 = vpop.f32.mrb[0].mxu0
    %v1603 = vadd.f32 %v1470, %v1602
    %v1604 = vpop.f32.mrb[0].mxu0
    %v1605 = vpop.f32.mrb[0].mxu0
    %v1606 = vadd.f32 %v1470, %v1605
    %v1607 = vpop.f32.mrb[0].mxu0
    %1608 = vmatprep.mubr.bf16.mxu0 %v1373
    %1609 = vmatmul.mubr.bf16.gmra.mrb[0].mxu0 %v1372
    %v1610 = vpop.f32.mrb[0].mxu0
    %v1611 = vadd.f32 %v1470, %v1610
    %v1612 = vpop.f32.mrb[0].mxu0
    %v1613 = vpop.f32.mrb[0].mxu0
    %v1614 = vadd.f32 %v1470, %v1613
    %v1615 = vpop.f32.mrb[0].mxu0
    %1616 = vmatprep.mubr.bf16.mxu0 %v1375
    %1617 = vmatmul.mubr.bf16.gmra.mrb[0].mxu0 %v1374
    %v1618 = vpop.f32.mrb[0].mxu0
    %v1619 = vadd.f32 %v1470, %v1618
    %v1620 = vpop.f32.mrb[0].mxu0
    %v1621 = vpop.f32.mrb[0].mxu0
    %v1622 = vadd.f32 %v1470, %v1621
    %v1623 = vpop.f32.mrb[0].mxu0
    %1624 = vmatprep.mubr.bf16.mxu0 %v1377
    %1625 = vmatmul.mubr.bf16.gmra.mrb[0].mxu0 %v1376
    %v1626 = vpop.f32.mrb[0].mxu0
    %v1627 = vadd.f32 %v1470, %v1626
    %v1628 = vpop.f32.mrb[0].mxu0
    %v1629 = vpop.f32.mrb[0].mxu0
    %v1630 = vadd.f32 %v1470, %v1629
    %v1631 = vpop.f32.mrb[0].mxu0
    %1632 = vmatprep.mubr.bf16.mxu0 %v1379
    %1633 = vmatmul.mubr.bf16.gmra.mrb[0].mxu0 %v1378
    %v1634 = vpop.f32.mrb[0].mxu0
    %v1635 = vadd.f32 %v1470, %v1634
    %v1636 = vpop.f32.mrb[0].mxu0
    %v1637 = vpop.f32.mrb[0].mxu0
    %v1638 = vadd.f32 %v1470, %v1637
    %v1639 = vpop.f32.mrb[0].mxu0
    %1640 = vmatprep.mubr.bf16.mxu0 %v1381
    %1641 = vmatmul.mubr.bf16.gmra.mrb[0].mxu0 %v1380
    %v1642 = vpop.f32.mrb[0].mxu0
    %v1643 = vadd.f32 %v1470, %v1642
    %v1644 = vpop.f32.mrb[0].mxu0
    %v1645 = vpop.f32.mrb[0].mxu0
    %v1646 = vadd.f32 %v1470, %v1645
    %v1647 = vpop.f32.mrb[0].mxu0
    %1648 = vmatprep.mubr.bf16.mxu0 %v1383
    %1649 = vmatmul.mubr.bf16.gmra.mrb[0].mxu0 %v1382
    %v1650 = vpop.f32.mrb[0].mxu0
    %v1651 = vadd.f32 %v1470, %v1650
    %v1652 = vpop.f32.mrb[0].mxu0
    %v1653 = vpop.f32.mrb[0].mxu0
    %v1654 = vadd.f32 %v1470, %v1653
    %v1655 = vpop.f32.mrb[0].mxu0
    %1656 = vmatprep.mubr.bf16.mxu0 %v1385
    %1657 = vmatmul.mubr.bf16.gmra.mrb[0].mxu0 %v1384
    %v1658 = vpop.f32.mrb[0].mxu0
    %v1659 = vadd.f32 %v1470, %v1658
    %v1660 = vpop.f32.mrb[0].mxu0
    %v1661 = vpop.f32.mrb[0].mxu0
    %v1662 = vadd.f32 %v1470, %v1661
    %v1663 = vpop.f32.mrb[0].mxu0
    %1664 = vmatprep.mubr.bf16.mxu0 %v1387
    %1665 = vmatmul.mubr.bf16.gmra.mrb[0].mxu0 %v1386
    %v1666 = vpop.f32.mrb[0].mxu0
    %v1667 = vadd.f32 %v1470, %v1666
    %v1668 = vpop.f32.mrb[0].mxu0
    %v1669 = vpop.f32.mrb[0].mxu0
    %v1670 = vadd.f32 %v1470, %v1669
    %v1671 = vpop.f32.mrb[0].mxu0
    %1672 = vmatprep.mubr.bf16.mxu0 %v1389
    %1673 = vmatmul.mubr.bf16.gmra.mrb[0].mxu0 %v1388
    %v1674 = vpop.f32.mrb[0].mxu0
    %v1675 = vadd.f32 %v1470, %v1674
    %v1676 = vpop.f32.mrb[0].mxu0
    %v1677 = vpop.f32.mrb[0].mxu0
    %v1678 = vadd.f32 %v1470, %v1677
    %v1679 = vpop.f32.mrb[0].mxu0
    %1680 = vmatprep.mubr.bf16.mxu0 %v1391
    %1681 = vmatmul.mubr.bf16.gmra.mrb[0].mxu0 %v1390
    %v1682 = vpop.f32.mrb[0].mxu0
    %v1683 = vadd.f32 %v1470, %v1682
    %v1684 = vpop.f32.mrb[0].mxu0
    %v1685 = vpop.f32.mrb[0].mxu0
    %v1686 = vadd.f32 %v1470, %v1685
    %v1687 = vpop.f32.mrb[0].mxu0
    %1688 = vmatprep.mubr.bf16.mxu0 %v1393
    %1689 = vmatmul.mubr.bf16.gmra.mrb[0].mxu0 %v1392
    %v1690 = vpop.f32.mrb[0].mxu0
    %v1691 = vadd.f32 %v1470, %v1690
    %v1692 = vpop.f32.mrb[0].mxu0
    %v1693 = vpop.f32.mrb[0].mxu0
    %v1694 = vadd.f32 %v1470, %v1693
    %v1695 = vpop.f32.mrb[0].mxu0
    %1696 = vmatprep.mubr.bf16.mxu0 %v1395
    %1697 = vmatmul.mubr.bf16.gmra.mrb[0].mxu0 %v1394
    %v1698 = vpop.f32.mrb[0].mxu0
    %v1699 = vadd.f32 %v1470, %v1698
    %v1700 = vpop.f32.mrb[0].mxu0
    %v1701 = vpop.f32.mrb[0].mxu0
    %v1702 = vadd.f32 %v1470, %v1701
    %v1703 = vpop.f32.mrb[0].mxu0
    %1704 = vmatprep.mubr.bf16.mxu0 %v1397
    %1705 = vmatmul.mubr.bf16.gmra.mrb[0].mxu0 %v1396
    %v1706 = vpop.f32.mrb[0].mxu0
    %v1707 = vadd.f32 %v1470, %v1706
    %v1708 = vpop.f32.mrb[0].mxu0
    %v1709 = vpop.f32.mrb[0].mxu0
    %v1710 = vadd.f32 %v1470, %v1709
    %v1711 = vpop.f32.mrb[0].mxu0
    %1712 = vmatprep.mubr.bf16.mxu0 %v1399
    %1713 = vmatmul.mubr.bf16.gmra.mrb[0].mxu0 %v1398
    %v1714 = vpop.f32.mrb[0].mxu0
    %v1715 = vadd.f32 %v1470, %v1714
    %v1716 = vpop.f32.mrb[0].mxu0
    %v1717 = vpop.f32.mrb[0].mxu0
    %v1718 = vadd.f32 %v1470, %v1717
    %v1719 = vpop.f32.mrb[0].mxu0
    %1720 = vmatprep.mubr.bf16.mxu0 %v1401
    %1721 = vmatmul.mubr.bf16.gmra.mrb[0].mxu0 %v1400
    %v1722 = vpop.f32.mrb[0].mxu0
    %v1723 = vadd.f32 %v1470, %v1722
    %v1724 = vpop.f32.mrb[0].mxu0
    %v1725 = vpop.f32.mrb[0].mxu0
    %v1726 = vadd.f32 %v1470, %v1725
    %v1727 = vpop.f32.mrb[0].mxu0
    %1728 = vmatprep.mubr.bf16.mxu0 %v1403
    %1729 = vmatmul.mubr.bf16.gmra.mrb[0].mxu0 %v1402
    %v1730 = vpop.f32.mrb[0].mxu0
    %v1731 = vadd.f32 %v1470, %v1730
    %v1732 = vpop.f32.mrb[0].mxu0
    %v1733 = vpop.f32.mrb[0].mxu0
    %v1734 = vadd.f32 %v1470, %v1733
    %v1735 = vpop.f32.mrb[0].mxu0
    %1736 = vmatprep.mubr.bf16.mxu0 %v1405
    %1737 = vmatmul.mubr.bf16.gmra.mrb[0].mxu0 %v1404
    %v1738 = vpop.f32.mrb[0].mxu0
    %v1739 = vadd.f32 %v1470, %v1738
    %v1740 = vpop.f32.mrb[0].mxu0
    %v1741 = vpop.f32.mrb[0].mxu0
    %v1742 = vadd.f32 %v1470, %v1741
    %v1743 = vpop.f32.mrb[0].mxu0
    %1744 = vmatprep.mubr.bf16.mxu0 %v1407
    %1745 = vmatmul.mubr.bf16.gmra.mrb[0].mxu0 %v1406
    %v1746 = vpop.f32.mrb[0].mxu0
    %v1747 = vadd.f32 %v1470, %v1746
    %v1748 = vpop.f32.mrb[0].mxu0
    %v1749 = vpop.f32.mrb[0].mxu0
    %v1750 = vadd.f32 %v1470, %v1749
    %v1751 = vpop.f32.mrb[0].mxu0
    %1752 = vmatprep.mubr.bf16.mxu0 %v1409
    %1753 = vmatmul.mubr.bf16.gmra.mrb[0].mxu0 %v1408
    %v1754 = vpop.f32.mrb[0].mxu0
    %v1755 = vadd.f32 %v1470, %v1754
    %v1756 = vpop.f32.mrb[0].mxu0
    %v1757 = vpop.f32.mrb[0].mxu0
    %v1758 = vadd.f32 %v1470, %v1757
    %v1759 = vpop.f32.mrb[0].mxu0
    %1760 = vmatprep.mubr.bf16.mxu0 %v1411
    %1761 = vmatmul.mubr.bf16.gmra.mrb[0].mxu0 %v1410
    %v1762 = vpop.f32.mrb[0].mxu0
    %v1763 = vadd.f32 %v1470, %v1762
    %v1764 = vpop.f32.mrb[0].mxu0
    %v1765 = vpop.f32.mrb[0].mxu0
    %v1766 = vadd.f32 %v1470, %v1765
    %v1767 = vpop.f32.mrb[0].mxu0
    %1768 = vmatprep.mubr.bf16.mxu0 %v1413
    %1769 = vmatmul.mubr.bf16.gmra.mrb[0].mxu0 %v1412
    %v1770 = vpop.f32.mrb[0].mxu0
    %v1771 = vadd.f32 %v1470, %v1770
    %v1772 = vpop.f32.mrb[0].mxu0
    %v1773 = vpop.f32.mrb[0].mxu0
    %v1774 = vadd.f32 %v1470, %v1773
    %v1775 = vpop.f32.mrb[0].mxu0
    %1776 = vmatprep.mubr.bf16.mxu0 %v1415
    %1777 = vmatmul.mubr.bf16.gmra.mrb[0].mxu0 %v1414
    %v1778 = vpop.f32.mrb[0].mxu0
    %v1779 = vadd.f32 %v1470, %v1778
    %v1780 = vpop.f32.mrb[0].mxu0
    %v1781 = vpop.f32.mrb[0].mxu0
    %v1782 = vadd.f32 %v1470, %v1781
    %v1783 = vpop.f32.mrb[0].mxu0
    %1784 = vmatprep.mubr.bf16.mxu0 %v1417
    %1785 = vmatmul.mubr.bf16.gmra.mrb[0].mxu0 %v1416
    %v1786 = vpop.f32.mrb[0].mxu0
    %v1787 = vadd.f32 %v1470, %v1786
    %v1788 = vpop.f32.mrb[0].mxu0
    %v1789 = vpop.f32.mrb[0].mxu0
    %v1790 = vadd.f32 %v1470, %v1789
    %v1791 = vpop.f32.mrb[0].mxu0
    %1792 = vmatprep.mubr.bf16.mxu0 %v1419
    %1793 = vmatmul.mubr.bf16.gmra.mrb[0].mxu0 %v1418
    %v1794 = vpop.f32.mrb[0].mxu0
    %v1795 = vadd.f32 %v1470, %v1794
    %v1796 = vpop.f32.mrb[0].mxu0
    %v1797 = vpop.f32.mrb[0].mxu0
    %v1798 = vadd.f32 %v1470, %v1797
    %v1799 = vpop.f32.mrb[0].mxu0
    %1800 = vmatprep.mubr.bf16.mxu0 %v1421
    %1801 = vmatmul.mubr.bf16.gmra.mrb[0].mxu0 %v1420
    %v1802 = vpop.f32.mrb[0].mxu0
    %v1803 = vadd.f32 %v1470, %v1802
    %v1804 = vpop.f32.mrb[0].mxu0
    %v1805 = vpop.f32.mrb[0].mxu0
    %v1806 = vadd.f32 %v1470, %v1805
    %v1807 = vpop.f32.mrb[0].mxu0
    %1808 = vmatprep.mubr.bf16.mxu0 %v1423
    %1809 = vmatmul.mubr.bf16.gmra.mrb[0].mxu0 %v1422
    %v1810 = vpop.f32.mrb[0].mxu0
    %v1811 = vadd.f32 %v1470, %v1810
    %v1812 = vpop.f32.mrb[0].mxu0
    %v1813 = vpop.f32.mrb[0].mxu0
    %v1814 = vadd.f32 %v1470, %v1813
    %v1815 = vpop.f32.mrb[0].mxu0
    %1816 = vmatprep.mubr.bf16.mxu0 %v1425
    %1817 = vmatmul.mubr.bf16.gmra.mrb[0].mxu0 %v1424
    %v1818 = vpop.f32.mrb[0].mxu0
    %v1819 = vadd.f32 %v1470, %v1818
    %v1820 = vpop.f32.mrb[0].mxu0
    %v1821 = vpop.f32.mrb[0].mxu0
    %v1822 = vadd.f32 %v1470, %v1821
    %v1823 = vpop.f32.mrb[0].mxu0
    %1824 = vmatprep.mubr.bf16.mxu0 %v1427
    %1825 = vmatmul.mubr.bf16.gmra.mrb[0].mxu0 %v1426
    %v1826 = vpop.f32.mrb[0].mxu0
    %v1827 = vadd.f32 %v1470, %v1826
    %v1828 = vpop.f32.mrb[0].mxu0
    %v1829 = vpop.f32.mrb[0].mxu0
    %v1830 = vadd.f32 %v1470, %v1829
    %v1831 = vpop.f32.mrb[0].mxu0
    %1832 = vmatprep.mubr.bf16.mxu0 %v1429
    %1833 = vmatmul.mubr.bf16.gmra.mrb[0].mxu0 %v1428
    %v1834 = vpop.f32.mrb[0].mxu0
    %v1835 = vadd.f32 %v1470, %v1834
    %v1836 = vpop.f32.mrb[0].mxu0
    %v1837 = vpop.f32.mrb[0].mxu0
    %v1838 = vadd.f32 %v1470, %v1837
    %v1839 = vpop.f32.mrb[0].mxu0
    %1840 = vmatprep.mubr.bf16.mxu0 %v1431
    %1841 = vmatmul.mubr.bf16.gmra.mrb[0].mxu0 %v1430
    %v1842 = vpop.f32.mrb[0].mxu0
    %v1843 = vadd.f32 %v1470, %v1842
    %v1844 = vpop.f32.mrb[0].mxu0
    %v1845 = vpop.f32.mrb[0].mxu0
    %v1846 = vadd.f32 %v1470, %v1845
    %v1847 = vpop.f32.mrb[0].mxu0
    %1848 = vmatprep.mubr.bf16.mxu0 %v1433
    %1849 = vmatmul.mubr.bf16.gmra.mrb[0].mxu0 %v1432
    %v1850 = vpop.f32.mrb[0].mxu0
    %v1851 = vadd.f32 %v1470, %v1850
    %v1852 = vpop.f32.mrb[0].mxu0
    %v1853 = vpop.f32.mrb[0].mxu0
    %v1854 = vadd.f32 %v1470, %v1853
    %v1855 = vpop.f32.mrb[0].mxu0
    %1856 = vdwg.mxu0
    %v1857 = vmul.f32 %v1603, 0.01
    %v1858 = vmul.f32 %v1606, 0.01
    %v1859 = vmul.f32 %v1611, 0.01
    %v1860 = vmul.f32 %v1614, 0.01
    %v1861 = vmul.f32 %v1619, 0.01
    %v1862 = vmul.f32 %v1622, 0.01
    %v1863 = vmul.f32 %v1627, 0.01
    %v1864 = vmul.f32 %v1630, 0.01
    %v1865 = vmul.f32 %v1635, 0.01
    %v1866 = vmul.f32 %v1638, 0.01
    %v1867 = vmul.f32 %v1643, 0.01
    %v1868 = vmul.f32 %v1646, 0.01
    %v1869 = vmul.f32 %v1651, 0.01
    %v1870 = vmul.f32 %v1654, 0.01
    %v1871 = vmul.f32 %v1659, 0.01
    %v1872 = vmul.f32 %v1662, 0.01
    %v1873 = vmul.f32 %v1667, 0.01
    %v1874 = vmul.f32 %v1670, 0.01
    %v1875 = vmul.f32 %v1675, 0.01
    %v1876 = vmul.f32 %v1678, 0.01
    %v1877 = vmul.f32 %v1683, 0.01
    %v1878 = vmul.f32 %v1686, 0.01
    %v1879 = vmul.f32 %v1691, 0.01
    %v1880 = vmul.f32 %v1694, 0.01
    %v1881 = vmul.f32 %v1699, 0.01
    %v1882 = vmul.f32 %v1702, 0.01
    %v1883 = vmul.f32 %v1707, 0.01
    %v1884 = vmul.f32 %v1710, 0.01
    %v1885 = vmul.f32 %v1715, 0.01
    %v1886 = vmul.f32 %v1718, 0.01
    %v1887 = vmul.f32 %v1723, 0.01
    %v1888 = vmul.f32 %v1726, 0.01
    %v1889 = vmul.f32 %v1731, 0.01
    %v1890 = vmul.f32 %v1734, 0.01
    %v1891 = vmul.f32 %v1739, 0.01
    %v1892 = vmul.f32 %v1742, 0.01
    %v1893 = vmul.f32 %v1747, 0.01
    %v1894 = vmul.f32 %v1750, 0.01
    %v1895 = vmul.f32 %v1755, 0.01
    %v1896 = vmul.f32 %v1758, 0.01
    %v1897 = vmul.f32 %v1763, 0.01
    %v1898 = vmul.f32 %v1766, 0.01
    %v1899 = vmul.f32 %v1771, 0.01
    %v1900 = vmul.f32 %v1774, 0.01
    %v1901 = vmul.f32 %v1779, 0.01
    %v1902 = vmul.f32 %v1782, 0.01
    %v1903 = vmul.f32 %v1787, 0.01
    %v1904 = vmul.f32 %v1790, 0.01
    %v1905 = vmul.f32 %v1795, 0.01
    %v1906 = vmul.f32 %v1798, 0.01
    %v1907 = vmul.f32 %v1803, 0.01
    %v1908 = vmul.f32 %v1806, 0.01
    %v1909 = vmul.f32 %v1811, 0.01
    %v1910 = vmul.f32 %v1814, 0.01
    %v1911 = vmul.f32 %v1819, 0.01
    %v1912 = vmul.f32 %v1822, 0.01
    %v1913 = vmul.f32 %v1827, 0.01
    %v1914 = vmul.f32 %v1830, 0.01
    %v1915 = vmul.f32 %v1835, 0.01
    %v1916 = vmul.f32 %v1838, 0.01
    %v1917 = vmul.f32 %v1843, 0.01
    %v1918 = vmul.f32 %v1846, 0.01
    %v1919 = vmul.f32 %v1851, 0.01
    %v1920 = vmul.f32 %v1854, 0.01
    %v1921 = vmax.f32 %v1603, %v1857
    %v1922 = vmax.f32 %v1606, %v1858
    %v1923 = vmax.f32 %v1611, %v1859
    %v1924 = vmax.f32 %v1614, %v1860
    %v1925 = vmax.f32 %v1619, %v1861
    %v1926 = vmax.f32 %v1622, %v1862
    %v1927 = vmax.f32 %v1627, %v1863
    %v1928 = vmax.f32 %v1630, %v1864
    %v1929 = vmax.f32 %v1635, %v1865
    %v1930 = vmax.f32 %v1638, %v1866
    %v1931 = vmax.f32 %v1643, %v1867
    %v1932 = vmax.f32 %v1646, %v1868
    %v1933 = vmax.f32 %v1651, %v1869
    %v1934 = vmax.f32 %v1654, %v1870
    %v1935 = vmax.f32 %v1659, %v1871
    %v1936 = vmax.f32 %v1662, %v1872
    %v1937 = vmax.f32 %v1667, %v1873
    %v1938 = vmax.f32 %v1670, %v1874
    %v1939 = vmax.f32 %v1675, %v1875
    %v1940 = vmax.f32 %v1678, %v1876
    %v1941 = vmax.f32 %v1683, %v1877
    %v1942 = vmax.f32 %v1686, %v1878
    %v1943 = vmax.f32 %v1691, %v1879
    %v1944 = vmax.f32 %v1694, %v1880
    %v1945 = vmax.f32 %v1699, %v1881
    %v1946 = vmax.f32 %v1702, %v1882
    %v1947 = vmax.f32 %v1707, %v1883
    %v1948 = vmax.f32 %v1710, %v1884
    %v1949 = vmax.f32 %v1715, %v1885
    %v1950 = vmax.f32 %v1718, %v1886
    %v1951 = vmax.f32 %v1723, %v1887
    %v1952 = vmax.f32 %v1726, %v1888
    %v1953 = vmax.f32 %v1731, %v1889
    %v1954 = vmax.f32 %v1734, %v1890
    %v1955 = vmax.f32 %v1739, %v1891
    %v1956 = vmax.f32 %v1742, %v1892
    %v1957 = vmax.f32 %v1747, %v1893
    %v1958 = vmax.f32 %v1750, %v1894
    %v1959 = vmax.f32 %v1755, %v1895
    %v1960 = vmax.f32 %v1758, %v1896
    %v1961 = vmax.f32 %v1763, %v1897
    %v1962 = vmax.f32 %v1766, %v1898
    %v1963 = vmax.f32 %v1771, %v1899
    %v1964 = vmax.f32 %v1774, %v1900
    %v1965 = vmax.f32 %v1779, %v1901
    %v1966 = vmax.f32 %v1782, %v1902
    %v1967 = vmax.f32 %v1787, %v1903
    %v1968 = vmax.f32 %v1790, %v1904
    %v1969 = vmax.f32 %v1795, %v1905
    %v1970 = vmax.f32 %v1798, %v1906
    %v1971 = vmax.f32 %v1803, %v1907
    %v1972 = vmax.f32 %v1806, %v1908
    %v1973 = vmax.f32 %v1811, %v1909
    %v1974 = vmax.f32 %v1814, %v1910
    %v1975 = vmax.f32 %v1819, %v1911
    %v1976 = vmax.f32 %v1822, %v1912
    %v1977 = vmax.f32 %v1827, %v1913
    %v1978 = vmax.f32 %v1830, %v1914
    %v1979 = vmax.f32 %v1835, %v1915
    %v1980 = vmax.f32 %v1838, %v1916
    %v1981 = vmax.f32 %v1843, %v1917
    %v1982 = vmax.f32 %v1846, %v1918
    %v1983 = vmax.f32 %v1851, %v1919
    %v1984 = vmax.f32 %v1854, %v1920
    %v1985 = vpack.c.bf16 %v1922, %v1921
    %v1986 = vpack.c.bf16 %v1924, %v1923
    %v1987 = vpack.c.bf16 %v1926, %v1925
    %v1988 = vpack.c.bf16 %v1928, %v1927
    %v1989 = vpack.c.bf16 %v1930, %v1929
    %v1990 = vpack.c.bf16 %v1932, %v1931
    %v1991 = vpack.c.bf16 %v1934, %v1933
    %v1992 = vpack.c.bf16 %v1936, %v1935
    %v1993 = vpack.c.bf16 %v1938, %v1937
    %v1994 = vpack.c.bf16 %v1940, %v1939
    %v1995 = vpack.c.bf16 %v1942, %v1941
    %v1996 = vpack.c.bf16 %v1944, %v1943
    %v1997 = vpack.c.bf16 %v1946, %v1945
    %v1998 = vpack.c.bf16 %v1948, %v1947
    %v1999 = vpack.c.bf16 %v1950, %v1949
    %v2000 = vpack.c.bf16 %v1952, %v1951
    %v2001 = vpack.c.bf16 %v1954, %v1953
    %v2002 = vpack.c.bf16 %v1956, %v1955
    %v2003 = vpack.c.bf16 %v1958, %v1957
    %v2004 = vpack.c.bf16 %v1960, %v1959
    %v2005 = vpack.c.bf16 %v1962, %v1961
    %v2006 = vpack.c.bf16 %v1964, %v1963
    %v2007 = vpack.c.bf16 %v1966, %v1965
    %v2008 = vpack.c.bf16 %v1968, %v1967
    %v2009 = vpack.c.bf16 %v1970, %v1969
    %v2010 = vpack.c.bf16 %v1972, %v1971
    %v2011 = vpack.c.bf16 %v1974, %v1973
    %v2012 = vpack.c.bf16 %v1976, %v1975
    %v2013 = vpack.c.bf16 %v1978, %v1977
    %v2014 = vpack.c.bf16 %v1980, %v1979
    %v2015 = vpack.c.bf16 %v1982, %v1981
    %v2016 = vpack.c.bf16 %v1984, %v1983
    %v2017 = vld [vmem:[%s7] sm:$0xf]
    %v2018 = vld [vmem:[%s7 + $0x4] sm:$0xf]
    %v2019 = vld [vmem:[%s7 + $0x8] sm:$0xf]
    %v2020 = vld [vmem:[%s7 + $0xc] sm:$0xf]
    %v2021 = vld [vmem:[%s7 + $0x10] sm:$0xf]
    %v2022 = vld [vmem:[%s7 + $0x14] sm:$0xf]
    %v2023 = vld [vmem:[%s7 + $0x18] sm:$0xf]
    %v2024 = vld [vmem:[%s7 + $0x1c] sm:$0xf]
    %v2025 = vld [vmem:[%s7 + $0x20] sm:$0xf]
    %v2026 = vld [vmem:[%s7 + $0x24] sm:$0xf]
    %v2027 = vld [vmem:[%s7 + $0x28] sm:$0xf]
    %v2028 = vld [vmem:[%s7 + $0x2c] sm:$0xf]
    %v2029 = vld [vmem:[%s7 + $0x30] sm:$0xf]
    %v2030 = vld [vmem:[%s7 + $0x34] sm:$0xf]
    %v2031 = vld [vmem:[%s7 + $0x38] sm:$0xf]
    %v2032 = vld [vmem:[%s7 + $0x3c] sm:$0xf]
    %v2034 = vlaneseq
    %v2035 = vshrl.u32 %v2034, 7
    %v2036 = vsub.s32 0, %v2035
    %v2037 = vrot.slane %v133, %v2036
    %v2055 = vunpack.c.l.b16 %v2017
    %v2056 = vunpack.c.l.b16 %v2018
    %v2057 = vunpack.c.l.b16 %v2019
    %v2058 = vunpack.c.l.b16 %v2020
    %v2059 = vunpack.c.l.b16 %v2021
    %v2060 = vunpack.c.l.b16 %v2022
    %v2061 = vunpack.c.l.b16 %v2023
    %v2062 = vunpack.c.l.b16 %v2024
    %v2063 = vunpack.c.l.b16 %v2025
    %v2064 = vunpack.c.l.b16 %v2026
    %v2065 = vunpack.c.l.b16 %v2027
    %v2066 = vunpack.c.l.b16 %v2028
    %v2067 = vunpack.c.l.b16 %v2029
    %v2068 = vunpack.c.l.b16 %v2030
    %v2069 = vunpack.c.l.b16 %v2031
    %v2070 = vunpack.c.l.b16 %v2032
    %v2071 = vpack.c.b16 %v2056, %v2055
    %v2072 = vpack.c.b16 %v2058, %v2057
    %v2073 = vpack.c.b16 %v2060, %v2059
    %v2074 = vpack.c.b16 %v2062, %v2061
    %v2075 = vpack.c.b16 %v2064, %v2063
    %v2076 = vpack.c.b16 %v2066, %v2065
    %v2077 = vpack.c.b16 %v2068, %v2067
    %v2078 = vpack.c.b16 %v2070, %v2069
    %2087 = vmatprep.subr.bf16.mxu0 0
    %2088 = vmatpush1.bf16.msra.mxu0 %v2071
    %2089 = vmatprep.subr.bf16.mxu0 0
    %2090 = vmatpush1.bf16.msra.mxu0 %v2072
    %2091 = vmatprep.subr.bf16.mxu0 0
    %2092 = vmatpush1.bf16.msra.mxu0 %v2073
    %2093 = vmatprep.subr.bf16.mxu0 0
    %2094 = vmatpush1.bf16.msra.mxu0 %v2074
    %2095 = vmatprep.subr.bf16.mxu0 0
    %2096 = vmatpush1.bf16.msra.mxu0 %v2075
    %2097 = vmatprep.subr.bf16.mxu0 0
    %2098 = vmatpush1.bf16.msra.mxu0 %v2076
    %2099 = vmatprep.subr.bf16.mxu0 0
    %2100 = vmatpush1.bf16.msra.mxu0 %v2077
    %2101 = vmatprep.subr.bf16.mxu0 0
    %2102 = vmatpush1.bf16.msra.mxu0 %v2078
    %2103 = vmatprep.subr.bf16.mxu0 0
    %2104 = vmatpush1.bf16.msra.mxu0 0
    %2105 = vmatprep.subr.bf16.mxu0 0
    %2106 = vmatpush1.bf16.msra.mxu0 0
    %2107 = vmatprep.subr.bf16.mxu0 0
    %2108 = vmatpush1.bf16.msra.mxu0 0
    %2109 = vmatprep.subr.bf16.mxu0 0
    %2110 = vmatpush1.bf16.msra.mxu0 0
    %2111 = vmatprep.subr.bf16.mxu0 0
    %2112 = vmatpush1.bf16.msra.mxu0 0
    %2113 = vmatprep.subr.bf16.mxu0 0
    %2114 = vmatpush1.bf16.msra.mxu0 0
    %2115 = vmatprep.subr.bf16.mxu0 0
    %2116 = vmatpush1.bf16.msra.mxu0 0
    %2117 = vmatprep.subr.bf16.mxu0 0
    %2118 = vmatpush1.bf16.msra.mxu0 0
    %2119 = vmatprep.mubr.bf16.mxu0 0
    %2120 = vmatmul.mubr.bf16.gmra.mrb[0].mxu0 %v1985
    %v2121 = vpop.f32.mrb[0].mxu0
    %v2122 = vadd.f32 %v2037, %v2121
    %v2123 = vpop.f32.mrb[0].mxu0
    %v2124 = vpop.f32.mrb[0].mxu0
    %v2125 = vadd.f32 %v2037, %v2124
    %v2126 = vpop.f32.mrb[0].mxu0
    %2127 = vmatprep.mubr.bf16.mxu0 0
    %2128 = vmatmul.mubr.bf16.gmra.mrb[0].mxu0 %v1986
    %v2129 = vpop.f32.mrb[0].mxu0
    %v2130 = vadd.f32 %v2037, %v2129
    %v2131 = vpop.f32.mrb[0].mxu0
    %v2132 = vpop.f32.mrb[0].mxu0
    %v2133 = vadd.f32 %v2037, %v2132
    %v2134 = vpop.f32.mrb[0].mxu0
    %2135 = vmatprep.mubr.bf16.mxu0 0
    %2136 = vmatmul.mubr.bf16.gmra.mrb[0].mxu0 %v1987
    %v2137 = vpop.f32.mrb[0].mxu0
    %v2138 = vadd.f32 %v2037, %v2137
    %v2139 = vpop.f32.mrb[0].mxu0
    %v2140 = vpop.f32.mrb[0].mxu0
    %v2141 = vadd.f32 %v2037, %v2140
    %v2142 = vpop.f32.mrb[0].mxu0
    %2143 = vmatprep.mubr.bf16.mxu0 0
    %2144 = vmatmul.mubr.bf16.gmra.mrb[0].mxu0 %v1988
    %v2145 = vpop.f32.mrb[0].mxu0
    %v2146 = vadd.f32 %v2037, %v2145
    %v2147 = vpop.f32.mrb[0].mxu0
    %v2148 = vpop.f32.mrb[0].mxu0
    %v2149 = vadd.f32 %v2037, %v2148
    %v2150 = vpop.f32.mrb[0].mxu0
    %2151 = vmatprep.mubr.bf16.mxu0 0
    %2152 = vmatmul.mubr.bf16.gmra.mrb[0].mxu0 %v1989
    %v2153 = vpop.f32.mrb[0].mxu0
    %v2154 = vadd.f32 %v2037, %v2153
    %v2155 = vpop.f32.mrb[0].mxu0
    %v2156 = vpop.f32.mrb[0].mxu0
    %v2157 = vadd.f32 %v2037, %v2156
    %v2158 = vpop.f32.mrb[0].mxu0
    %2159 = vmatprep.mubr.bf16.mxu0 0
    %2160 = vmatmul.mubr.bf16.gmra.mrb[0].mxu0 %v1990
    %v2161 = vpop.f32.mrb[0].mxu0
    %v2162 = vadd.f32 %v2037, %v2161
    %v2163 = vpop.f32.mrb[0].mxu0
    %v2164 = vpop.f32.mrb[0].mxu0
    %v2165 = vadd.f32 %v2037, %v2164
    %v2166 = vpop.f32.mrb[0].mxu0
    %2167 = vmatprep.mubr.bf16.mxu0 0
    %2168 = vmatmul.mubr.bf16.gmra.mrb[0].mxu0 %v1991
    %v2169 = vpop.f32.mrb[0].mxu0
    %v2170 = vadd.f32 %v2037, %v2169
    %v2171 = vpop.f32.mrb[0].mxu0
    %v2172 = vpop.f32.mrb[0].mxu0
    %v2173 = vadd.f32 %v2037, %v2172
    %v2174 = vpop.f32.mrb[0].mxu0
    %2175 = vmatprep.mubr.bf16.mxu0 0
    %2176 = vmatmul.mubr.bf16.gmra.mrb[0].mxu0 %v1992
    %v2177 = vpop.f32.mrb[0].mxu0
    %v2178 = vadd.f32 %v2037, %v2177
    %v2179 = vpop.f32.mrb[0].mxu0
    %v2180 = vpop.f32.mrb[0].mxu0
    %v2181 = vadd.f32 %v2037, %v2180
    %v2182 = vpop.f32.mrb[0].mxu0
    %2183 = vmatprep.mubr.bf16.mxu0 0
    %2184 = vmatmul.mubr.bf16.gmra.mrb[0].mxu0 %v1993
    %v2185 = vpop.f32.mrb[0].mxu0
    %v2186 = vadd.f32 %v2037, %v2185
    %v2187 = vpop.f32.mrb[0].mxu0
    %v2188 = vpop.f32.mrb[0].mxu0
    %v2189 = vadd.f32 %v2037, %v2188
    %v2190 = vpop.f32.mrb[0].mxu0
    %2191 = vmatprep.mubr.bf16.mxu0 0
    %2192 = vmatmul.mubr.bf16.gmra.mrb[0].mxu0 %v1994
    %v2193 = vpop.f32.mrb[0].mxu0
    %v2194 = vadd.f32 %v2037, %v2193
    %v2195 = vpop.f32.mrb[0].mxu0
    %v2196 = vpop.f32.mrb[0].mxu0
    %v2197 = vadd.f32 %v2037, %v2196
    %v2198 = vpop.f32.mrb[0].mxu0
    %2199 = vmatprep.mubr.bf16.mxu0 0
    %2200 = vmatmul.mubr.bf16.gmra.mrb[0].mxu0 %v1995
    %v2201 = vpop.f32.mrb[0].mxu0
    %v2202 = vadd.f32 %v2037, %v2201
    %v2203 = vpop.f32.mrb[0].mxu0
    %v2204 = vpop.f32.mrb[0].mxu0
    %v2205 = vadd.f32 %v2037, %v2204
    %v2206 = vpop.f32.mrb[0].mxu0
    %2207 = vmatprep.mubr.bf16.mxu0 0
    %2208 = vmatmul.mubr.bf16.gmra.mrb[0].mxu0 %v1996
    %v2209 = vpop.f32.mrb[0].mxu0
    %v2210 = vadd.f32 %v2037, %v2209
    %v2211 = vpop.f32.mrb[0].mxu0
    %v2212 = vpop.f32.mrb[0].mxu0
    %v2213 = vadd.f32 %v2037, %v2212
    %v2214 = vpop.f32.mrb[0].mxu0
    %2215 = vmatprep.mubr.bf16.mxu0 0
    %2216 = vmatmul.mubr.bf16.gmra.mrb[0].mxu0 %v1997
    %v2217 = vpop.f32.mrb[0].mxu0
    %v2218 = vadd.f32 %v2037, %v2217
    %v2219 = vpop.f32.mrb[0].mxu0
    %v2220 = vpop.f32.mrb[0].mxu0
    %v2221 = vadd.f32 %v2037, %v2220
    %v2222 = vpop.f32.mrb[0].mxu0
    %2223 = vmatprep.mubr.bf16.mxu0 0
    %2224 = vmatmul.mubr.bf16.gmra.mrb[0].mxu0 %v1998
    %v2225 = vpop.f32.mrb[0].mxu0
    %v2226 = vadd.f32 %v2037, %v2225
    %v2227 = vpop.f32.mrb[0].mxu0
    %v2228 = vpop.f32.mrb[0].mxu0
    %v2229 = vadd.f32 %v2037, %v2228
    %v2230 = vpop.f32.mrb[0].mxu0
    %2231 = vmatprep.mubr.bf16.mxu0 0
    %2232 = vmatmul.mubr.bf16.gmra.mrb[0].mxu0 %v1999
    %v2233 = vpop.f32.mrb[0].mxu0
    %v2234 = vadd.f32 %v2037, %v2233
    %v2235 = vpop.f32.mrb[0].mxu0
    %v2236 = vpop.f32.mrb[0].mxu0
    %v2237 = vadd.f32 %v2037, %v2236
    %v2238 = vpop.f32.mrb[0].mxu0
    %2239 = vmatprep.mubr.bf16.mxu0 0
    %2240 = vmatmul.mubr.bf16.gmra.mrb[0].mxu0 %v2000
    %v2241 = vpop.f32.mrb[0].mxu0
    %v2242 = vadd.f32 %v2037, %v2241
    %v2243 = vpop.f32.mrb[0].mxu0
    %v2244 = vpop.f32.mrb[0].mxu0
    %v2245 = vadd.f32 %v2037, %v2244
    %v2246 = vpop.f32.mrb[0].mxu0
    %2247 = vmatprep.mubr.bf16.mxu0 0
    %2248 = vmatmul.mubr.bf16.gmra.mrb[0].mxu0 %v2001
    %v2249 = vpop.f32.mrb[0].mxu0
    %v2250 = vadd.f32 %v2037, %v2249
    %v2251 = vpop.f32.mrb[0].mxu0
    %v2252 = vpop.f32.mrb[0].mxu0
    %v2253 = vadd.f32 %v2037, %v2252
    %v2254 = vpop.f32.mrb[0].mxu0
    %2255 = vmatprep.mubr.bf16.mxu0 0
    %2256 = vmatmul.mubr.bf16.gmra.mrb[0].mxu0 %v2002
    %v2257 = vpop.f32.mrb[0].mxu0
    %v2258 = vadd.f32 %v2037, %v2257
    %v2259 = vpop.f32.mrb[0].mxu0
    %v2260 = vpop.f32.mrb[0].mxu0
    %v2261 = vadd.f32 %v2037, %v2260
    %v2262 = vpop.f32.mrb[0].mxu0
    %2263 = vmatprep.mubr.bf16.mxu0 0
    %2264 = vmatmul.mubr.bf16.gmra.mrb[0].mxu0 %v2003
    %v2265 = vpop.f32.mrb[0].mxu0
    %v2266 = vadd.f32 %v2037, %v2265
    %v2267 = vpop.f32.mrb[0].mxu0
    %v2268 = vpop.f32.mrb[0].mxu0
    %v2269 = vadd.f32 %v2037, %v2268
    %v2270 = vpop.f32.mrb[0].mxu0
    %2271 = vmatprep.mubr.bf16.mxu0 0
    %2272 = vmatmul.mubr.bf16.gmra.mrb[0].mxu0 %v2004
    %v2273 = vpop.f32.mrb[0].mxu0
    %v2274 = vadd.f32 %v2037, %v2273
    %v2275 = vpop.f32.mrb[0].mxu0
    %v2276 = vpop.f32.mrb[0].mxu0
    %v2277 = vadd.f32 %v2037, %v2276
    %v2278 = vpop.f32.mrb[0].mxu0
    %2279 = vmatprep.mubr.bf16.mxu0 0
    %2280 = vmatmul.mubr.bf16.gmra.mrb[0].mxu0 %v2005
    %v2281 = vpop.f32.mrb[0].mxu0
    %v2282 = vadd.f32 %v2037, %v2281
    %v2283 = vpop.f32.mrb[0].mxu0
    %v2284 = vpop.f32.mrb[0].mxu0
    %v2285 = vadd.f32 %v2037, %v2284
    %v2286 = vpop.f32.mrb[0].mxu0
    %2287 = vmatprep.mubr.bf16.mxu0 0
    %2288 = vmatmul.mubr.bf16.gmra.mrb[0].mxu0 %v2006
    %v2289 = vpop.f32.mrb[0].mxu0
    %v2290 = vadd.f32 %v2037, %v2289
    %v2291 = vpop.f32.mrb[0].mxu0
    %v2292 = vpop.f32.mrb[0].mxu0
    %v2293 = vadd.f32 %v2037, %v2292
    %v2294 = vpop.f32.mrb[0].mxu0
    %2295 = vmatprep.mubr.bf16.mxu0 0
    %2296 = vmatmul.mubr.bf16.gmra.mrb[0].mxu0 %v2007
    %v2297 = vpop.f32.mrb[0].mxu0
    %v2298 = vadd.f32 %v2037, %v2297
    %v2299 = vpop.f32.mrb[0].mxu0
    %v2300 = vpop.f32.mrb[0].mxu0
    %v2301 = vadd.f32 %v2037, %v2300
    %v2302 = vpop.f32.mrb[0].mxu0
    %2303 = vmatprep.mubr.bf16.mxu0 0
    %2304 = vmatmul.mubr.bf16.gmra.mrb[0].mxu0 %v2008
    %v2305 = vpop.f32.mrb[0].mxu0
    %v2306 = vadd.f32 %v2037, %v2305
    %v2307 = vpop.f32.mrb[0].mxu0
    %v2308 = vpop.f32.mrb[0].mxu0
    %v2309 = vadd.f32 %v2037, %v2308
    %v2310 = vpop.f32.mrb[0].mxu0
    %2311 = vmatprep.mubr.bf16.mxu0 0
    %2312 = vmatmul.mubr.bf16.gmra.mrb[0].mxu0 %v2009
    %v2313 = vpop.f32.mrb[0].mxu0
    %v2314 = vadd.f32 %v2037, %v2313
    %v2315 = vpop.f32.mrb[0].mxu0
    %v2316 = vpop.f32.mrb[0].mxu0
    %v2317 = vadd.f32 %v2037, %v2316
    %v2318 = vpop.f32.mrb[0].mxu0
    %2319 = vmatprep.mubr.bf16.mxu0 0
    %2320 = vmatmul.mubr.bf16.gmra.mrb[0].mxu0 %v2010
    %v2321 = vpop.f32.mrb[0].mxu0
    %v2322 = vadd.f32 %v2037, %v2321
    %v2323 = vpop.f32.mrb[0].mxu0
    %v2324 = vpop.f32.mrb[0].mxu0
    %v2325 = vadd.f32 %v2037, %v2324
    %v2326 = vpop.f32.mrb[0].mxu0
    %2327 = vmatprep.mubr.bf16.mxu0 0
    %2328 = vmatmul.mubr.bf16.gmra.mrb[0].mxu0 %v2011
    %v2329 = vpop.f32.mrb[0].mxu0
    %v2330 = vadd.f32 %v2037, %v2329
    %v2331 = vpop.f32.mrb[0].mxu0
    %v2332 = vpop.f32.mrb[0].mxu0
    %v2333 = vadd.f32 %v2037, %v2332
    %v2334 = vpop.f32.mrb[0].mxu0
    %2335 = vmatprep.mubr.bf16.mxu0 0
    %2336 = vmatmul.mubr.bf16.gmra.mrb[0].mxu0 %v2012
    %v2337 = vpop.f32.mrb[0].mxu0
    %v2338 = vadd.f32 %v2037, %v2337
    %v2339 = vpop.f32.mrb[0].mxu0
    %v2340 = vpop.f32.mrb[0].mxu0
    %v2341 = vadd.f32 %v2037, %v2340
    %v2342 = vpop.f32.mrb[0].mxu0
    %2343 = vmatprep.mubr.bf16.mxu0 0
    %2344 = vmatmul.mubr.bf16.gmra.mrb[0].mxu0 %v2013
    %v2345 = vpop.f32.mrb[0].mxu0
    %v2346 = vadd.f32 %v2037, %v2345
    %v2347 = vpop.f32.mrb[0].mxu0
    %v2348 = vpop.f32.mrb[0].mxu0
    %v2349 = vadd.f32 %v2037, %v2348
    %v2350 = vpop.f32.mrb[0].mxu0
    %2351 = vmatprep.mubr.bf16.mxu0 0
    %2352 = vmatmul.mubr.bf16.gmra.mrb[0].mxu0 %v2014
    %v2353 = vpop.f32.mrb[0].mxu0
    %v2354 = vadd.f32 %v2037, %v2353
    %v2355 = vpop.f32.mrb[0].mxu0
    %v2356 = vpop.f32.mrb[0].mxu0
    %v2357 = vadd.f32 %v2037, %v2356
    %v2358 = vpop.f32.mrb[0].mxu0
    %2359 = vmatprep.mubr.bf16.mxu0 0
    %2360 = vmatmul.mubr.bf16.gmra.mrb[0].mxu0 %v2015
    %v2361 = vpop.f32.mrb[0].mxu0
    %v2362 = vadd.f32 %v2037, %v2361
    %v2363 = vpop.f32.mrb[0].mxu0
    %v2364 = vpop.f32.mrb[0].mxu0
    %v2365 = vadd.f32 %v2037, %v2364
    %v2366 = vpop.f32.mrb[0].mxu0
    %2367 = vmatprep.mubr.bf16.mxu0 0
    %2368 = vmatmul.mubr.bf16.gmra.mrb[0].mxu0 %v2016
    %v2369 = vpop.f32.mrb[0].mxu0
    %v2370 = vadd.f32 %v2037, %v2369
    %v2371 = vpop.f32.mrb[0].mxu0
    %v2372 = vpop.f32.mrb[0].mxu0
    %v2373 = vadd.f32 %v2037, %v2372
    %v2374 = vpop.f32.mrb[0].mxu0
    %2375 = vdwg.mxu0
    %2376 = vmax.xlane.f32.xlu0 %v2122
    %v2377 = vpop.xlane.xlu0 %2376
    %2378 = vmax.xlane.f32.xlu0 %v2125
    %v2379 = vpop.xlane.xlu0 %2378
    %2380 = vmax.xlane.f32.xlu0 %v2130
    %v2381 = vpop.xlane.xlu0 %2380
    %2382 = vmax.xlane.f32.xlu0 %v2133
    %v2383 = vpop.xlane.xlu0 %2382
    %2384 = vmax.xlane.f32.xlu0 %v2138
    %v2385 = vpop.xlane.xlu0 %2384
    %2386 = vmax.xlane.f32.xlu0 %v2141
    %v2387 = vpop.xlane.xlu0 %2386
    %2388 = vmax.xlane.f32.xlu0 %v2146
    %v2389 = vpop.xlane.xlu0 %2388
    %2390 = vmax.xlane.f32.xlu0 %v2149
    %v2391 = vpop.xlane.xlu0 %2390
    %2392 = vmax.xlane.f32.xlu0 %v2154
    %v2393 = vpop.xlane.xlu0 %2392
    %2394 = vmax.xlane.f32.xlu0 %v2157
    %v2395 = vpop.xlane.xlu0 %2394
    %2396 = vmax.xlane.f32.xlu0 %v2162
    %v2397 = vpop.xlane.xlu0 %2396
    %2398 = vmax.xlane.f32.xlu0 %v2165
    %v2399 = vpop.xlane.xlu0 %2398
    %2400 = vmax.xlane.f32.xlu0 %v2170
    %v2401 = vpop.xlane.xlu0 %2400
    %2402 = vmax.xlane.f32.xlu0 %v2173
    %v2403 = vpop.xlane.xlu0 %2402
    %2404 = vmax.xlane.f32.xlu0 %v2178
    %v2405 = vpop.xlane.xlu0 %2404
    %2406 = vmax.xlane.f32.xlu0 %v2181
    %v2407 = vpop.xlane.xlu0 %2406
    %2408 = vmax.xlane.f32.xlu0 %v2186
    %v2409 = vpop.xlane.xlu0 %2408
    %2410 = vmax.xlane.f32.xlu0 %v2189
    %v2411 = vpop.xlane.xlu0 %2410
    %2412 = vmax.xlane.f32.xlu0 %v2194
    %v2413 = vpop.xlane.xlu0 %2412
    %2414 = vmax.xlane.f32.xlu0 %v2197
    %v2415 = vpop.xlane.xlu0 %2414
    %2416 = vmax.xlane.f32.xlu0 %v2202
    %v2417 = vpop.xlane.xlu0 %2416
    %2418 = vmax.xlane.f32.xlu0 %v2205
    %v2419 = vpop.xlane.xlu0 %2418
    %2420 = vmax.xlane.f32.xlu0 %v2210
    %v2421 = vpop.xlane.xlu0 %2420
    %2422 = vmax.xlane.f32.xlu0 %v2213
    %v2423 = vpop.xlane.xlu0 %2422
    %2424 = vmax.xlane.f32.xlu0 %v2218
    %v2425 = vpop.xlane.xlu0 %2424
    %2426 = vmax.xlane.f32.xlu0 %v2221
    %v2427 = vpop.xlane.xlu0 %2426
    %2428 = vmax.xlane.f32.xlu0 %v2226
    %v2429 = vpop.xlane.xlu0 %2428
    %2430 = vmax.xlane.f32.xlu0 %v2229
    %v2431 = vpop.xlane.xlu0 %2430
    %2432 = vmax.xlane.f32.xlu0 %v2234
    %v2433 = vpop.xlane.xlu0 %2432
    %2434 = vmax.xlane.f32.xlu0 %v2237
    %v2435 = vpop.xlane.xlu0 %2434
    %2436 = vmax.xlane.f32.xlu0 %v2242
    %v2437 = vpop.xlane.xlu0 %2436
    %2438 = vmax.xlane.f32.xlu0 %v2245
    %v2439 = vpop.xlane.xlu0 %2438
    %2440 = vmax.xlane.f32.xlu0 %v2250
    %v2441 = vpop.xlane.xlu0 %2440
    %2442 = vmax.xlane.f32.xlu0 %v2253
    %v2443 = vpop.xlane.xlu0 %2442
    %2444 = vmax.xlane.f32.xlu0 %v2258
    %v2445 = vpop.xlane.xlu0 %2444
    %2446 = vmax.xlane.f32.xlu0 %v2261
    %v2447 = vpop.xlane.xlu0 %2446
    %2448 = vmax.xlane.f32.xlu0 %v2266
    %v2449 = vpop.xlane.xlu0 %2448
    %2450 = vmax.xlane.f32.xlu0 %v2269
    %v2451 = vpop.xlane.xlu0 %2450
    %2452 = vmax.xlane.f32.xlu0 %v2274
    %v2453 = vpop.xlane.xlu0 %2452
    %2454 = vmax.xlane.f32.xlu0 %v2277
    %v2455 = vpop.xlane.xlu0 %2454
    %2456 = vmax.xlane.f32.xlu0 %v2282
    %v2457 = vpop.xlane.xlu0 %2456
    %2458 = vmax.xlane.f32.xlu0 %v2285
    %v2459 = vpop.xlane.xlu0 %2458
    %2460 = vmax.xlane.f32.xlu0 %v2290
    %v2461 = vpop.xlane.xlu0 %2460
    %2462 = vmax.xlane.f32.xlu0 %v2293
    %v2463 = vpop.xlane.xlu0 %2462
    %2464 = vmax.xlane.f32.xlu0 %v2298
    %v2465 = vpop.xlane.xlu0 %2464
    %2466 = vmax.xlane.f32.xlu0 %v2301
    %v2467 = vpop.xlane.xlu0 %2466
    %2468 = vmax.xlane.f32.xlu0 %v2306
    %v2469 = vpop.xlane.xlu0 %2468
    %2470 = vmax.xlane.f32.xlu0 %v2309
    %v2471 = vpop.xlane.xlu0 %2470
    %2472 = vmax.xlane.f32.xlu0 %v2314
    %v2473 = vpop.xlane.xlu0 %2472
    %2474 = vmax.xlane.f32.xlu0 %v2317
    %v2475 = vpop.xlane.xlu0 %2474
    %2476 = vmax.xlane.f32.xlu0 %v2322
    %v2477 = vpop.xlane.xlu0 %2476
    %2478 = vmax.xlane.f32.xlu0 %v2325
    %v2479 = vpop.xlane.xlu0 %2478
    %2480 = vmax.xlane.f32.xlu0 %v2330
    %v2481 = vpop.xlane.xlu0 %2480
    %2482 = vmax.xlane.f32.xlu0 %v2333
    %v2483 = vpop.xlane.xlu0 %2482
    %2484 = vmax.xlane.f32.xlu0 %v2338
    %v2485 = vpop.xlane.xlu0 %2484
    %2486 = vmax.xlane.f32.xlu0 %v2341
    %v2487 = vpop.xlane.xlu0 %2486
    %2488 = vmax.xlane.f32.xlu0 %v2346
    %v2489 = vpop.xlane.xlu0 %2488
    %2490 = vmax.xlane.f32.xlu0 %v2349
    %v2491 = vpop.xlane.xlu0 %2490
    %2492 = vmax.xlane.f32.xlu0 %v2354
    %v2493 = vpop.xlane.xlu0 %2492
    %2494 = vmax.xlane.f32.xlu0 %v2357
    %v2495 = vpop.xlane.xlu0 %2494
    %2496 = vmax.xlane.f32.xlu0 %v2362
    %v2497 = vpop.xlane.xlu0 %2496
    %2498 = vmax.xlane.f32.xlu0 %v2365
    %v2499 = vpop.xlane.xlu0 %2498
    %2500 = vmax.xlane.f32.xlu0 %v2370
    %v2501 = vpop.xlane.xlu0 %2500
    %2502 = vmax.xlane.f32.xlu0 %v2373
    %v2503 = vpop.xlane.xlu0 %2502
    %v2504 = vsub.f32 %v2122, %v2377
    %v2505 = vsub.f32 %v2125, %v2379
    %v2506 = vsub.f32 %v2130, %v2381
    %v2507 = vsub.f32 %v2133, %v2383
    %v2508 = vsub.f32 %v2138, %v2385
    %v2509 = vsub.f32 %v2141, %v2387
    %v2510 = vsub.f32 %v2146, %v2389
    %v2511 = vsub.f32 %v2149, %v2391
    %v2512 = vsub.f32 %v2154, %v2393
    %v2513 = vsub.f32 %v2157, %v2395
    %v2514 = vsub.f32 %v2162, %v2397
    %v2515 = vsub.f32 %v2165, %v2399
    %v2516 = vsub.f32 %v2170, %v2401
    %v2517 = vsub.f32 %v2173, %v2403
    %v2518 = vsub.f32 %v2178, %v2405
    %v2519 = vsub.f32 %v2181, %v2407
    %v2520 = vsub.f32 %v2186, %v2409
    %v2521 = vsub.f32 %v2189, %v2411
    %v2522 = vsub.f32 %v2194, %v2413
    %v2523 = vsub.f32 %v2197, %v2415
    %v2524 = vsub.f32 %v2202, %v2417
    %v2525 = vsub.f32 %v2205, %v2419
    %v2526 = vsub.f32 %v2210, %v2421
    %v2527 = vsub.f32 %v2213, %v2423
    %v2528 = vsub.f32 %v2218, %v2425
    %v2529 = vsub.f32 %v2221, %v2427
    %v2530 = vsub.f32 %v2226, %v2429
    %v2531 = vsub.f32 %v2229, %v2431
    %v2532 = vsub.f32 %v2234, %v2433
    %v2533 = vsub.f32 %v2237, %v2435
    %v2534 = vsub.f32 %v2242, %v2437
    %v2535 = vsub.f32 %v2245, %v2439
    %v2536 = vsub.f32 %v2250, %v2441
    %v2537 = vsub.f32 %v2253, %v2443
    %v2538 = vsub.f32 %v2258, %v2445
    %v2539 = vsub.f32 %v2261, %v2447
    %v2540 = vsub.f32 %v2266, %v2449
    %v2541 = vsub.f32 %v2269, %v2451
    %v2542 = vsub.f32 %v2274, %v2453
    %v2543 = vsub.f32 %v2277, %v2455
    %v2544 = vsub.f32 %v2282, %v2457
    %v2545 = vsub.f32 %v2285, %v2459
    %v2546 = vsub.f32 %v2290, %v2461
    %v2547 = vsub.f32 %v2293, %v2463
    %v2548 = vsub.f32 %v2298, %v2465
    %v2549 = vsub.f32 %v2301, %v2467
    %v2550 = vsub.f32 %v2306, %v2469
    %v2551 = vsub.f32 %v2309, %v2471
    %v2552 = vsub.f32 %v2314, %v2473
    %v2553 = vsub.f32 %v2317, %v2475
    %v2554 = vsub.f32 %v2322, %v2477
    %v2555 = vsub.f32 %v2325, %v2479
    %v2556 = vsub.f32 %v2330, %v2481
    %v2557 = vsub.f32 %v2333, %v2483
    %v2558 = vsub.f32 %v2338, %v2485
    %v2559 = vsub.f32 %v2341, %v2487
    %v2560 = vsub.f32 %v2346, %v2489
    %v2561 = vsub.f32 %v2349, %v2491
    %v2562 = vsub.f32 %v2354, %v2493
    %v2563 = vsub.f32 %v2357, %v2495
    %v2564 = vsub.f32 %v2362, %v2497
    %v2565 = vsub.f32 %v2365, %v2499
    %v2566 = vsub.f32 %v2370, %v2501
    %v2567 = vsub.f32 %v2373, %v2503
    %v2568 = vmul.f32 %v2504, 1.442695
    %v2569 = vpow.pop %v2568
    %v2570 = vmul.f32 %v2505, 1.442695
    %v2571 = vpow.pop %v2570
    %v2572 = vmul.f32 %v2506, 1.442695
    %v2573 = vpow.pop %v2572
    %v2574 = vmul.f32 %v2507, 1.442695
    %v2575 = vpow.pop %v2574
    %v2576 = vmul.f32 %v2508, 1.442695
    %v2577 = vpow.pop %v2576
    %v2578 = vmul.f32 %v2509, 1.442695
    %v2579 = vpow.pop %v2578
    %v2580 = vmul.f32 %v2510, 1.442695
    %v2581 = vpow.pop %v2580
    %v2582 = vmul.f32 %v2511, 1.442695
    %v2583 = vpow.pop %v2582
    %v2584 = vmul.f32 %v2512, 1.442695
    %v2585 = vpow.pop %v2584
    %v2586 = vmul.f32 %v2513, 1.442695
    %v2587 = vpow.pop %v2586
    %v2588 = vmul.f32 %v2514, 1.442695
    %v2589 = vpow.pop %v2588
    %v2590 = vmul.f32 %v2515, 1.442695
    %v2591 = vpow.pop %v2590
    %v2592 = vmul.f32 %v2516, 1.442695
    %v2593 = vpow.pop %v2592
    %v2594 = vmul.f32 %v2517, 1.442695
    %v2595 = vpow.pop %v2594
    %v2596 = vmul.f32 %v2518, 1.442695
    %v2597 = vpow.pop %v2596
    %v2598 = vmul.f32 %v2519, 1.442695
    %v2599 = vpow.pop %v2598
    %v2600 = vmul.f32 %v2520, 1.442695
    %v2601 = vpow.pop %v2600
    %v2602 = vmul.f32 %v2521, 1.442695
    %v2603 = vpow.pop %v2602
    %v2604 = vmul.f32 %v2522, 1.442695
    %v2605 = vpow.pop %v2604
    %v2606 = vmul.f32 %v2523, 1.442695
    %v2607 = vpow.pop %v2606
    %v2608 = vmul.f32 %v2524, 1.442695
    %v2609 = vpow.pop %v2608
    %v2610 = vmul.f32 %v2525, 1.442695
    %v2611 = vpow.pop %v2610
    %v2612 = vmul.f32 %v2526, 1.442695
    %v2613 = vpow.pop %v2612
    %v2614 = vmul.f32 %v2527, 1.442695
    %v2615 = vpow.pop %v2614
    %v2616 = vmul.f32 %v2528, 1.442695
    %v2617 = vpow.pop %v2616
    %v2618 = vmul.f32 %v2529, 1.442695
    %v2619 = vpow.pop %v2618
    %v2620 = vmul.f32 %v2530, 1.442695
    %v2621 = vpow.pop %v2620
    %v2622 = vmul.f32 %v2531, 1.442695
    %v2623 = vpow.pop %v2622
    %v2624 = vmul.f32 %v2532, 1.442695
    %v2625 = vpow.pop %v2624
    %v2626 = vmul.f32 %v2533, 1.442695
    %v2627 = vpow.pop %v2626
    %v2628 = vmul.f32 %v2534, 1.442695
    %v2629 = vpow.pop %v2628
    %v2630 = vmul.f32 %v2535, 1.442695
    %v2631 = vpow.pop %v2630
    %v2632 = vmul.f32 %v2536, 1.442695
    %v2633 = vpow.pop %v2632
    %v2634 = vmul.f32 %v2537, 1.442695
    %v2635 = vpow.pop %v2634
    %v2636 = vmul.f32 %v2538, 1.442695
    %v2637 = vpow.pop %v2636
    %v2638 = vmul.f32 %v2539, 1.442695
    %v2639 = vpow.pop %v2638
    %v2640 = vmul.f32 %v2540, 1.442695
    %v2641 = vpow.pop %v2640
    %v2642 = vmul.f32 %v2541, 1.442695
    %v2643 = vpow.pop %v2642
    %v2644 = vmul.f32 %v2542, 1.442695
    %v2645 = vpow.pop %v2644
    %v2646 = vmul.f32 %v2543, 1.442695
    %v2647 = vpow.pop %v2646
    %v2648 = vmul.f32 %v2544, 1.442695
    %v2649 = vpow.pop %v2648
    %v2650 = vmul.f32 %v2545, 1.442695
    %v2651 = vpow.pop %v2650
    %v2652 = vmul.f32 %v2546, 1.442695
    %v2653 = vpow.pop %v2652
    %v2654 = vmul.f32 %v2547, 1.442695
    %v2655 = vpow.pop %v2654
    %v2656 = vmul.f32 %v2548, 1.442695
    %v2657 = vpow.pop %v2656
    %v2658 = vmul.f32 %v2549, 1.442695
    %v2659 = vpow.pop %v2658
    %v2660 = vmul.f32 %v2550, 1.442695
    %v2661 = vpow.pop %v2660
    %v2662 = vmul.f32 %v2551, 1.442695
    %v2663 = vpow.pop %v2662
    %v2664 = vmul.f32 %v2552, 1.442695
    %v2665 = vpow.pop %v2664
    %v2666 = vmul.f32 %v2553, 1.442695
    %v2667 = vpow.pop %v2666
    %v2668 = vmul.f32 %v2554, 1.442695
    %v2669 = vpow.pop %v2668
    %v2670 = vmul.f32 %v2555, 1.442695
    %v2671 = vpow.pop %v2670
    %v2672 = vmul.f32 %v2556, 1.442695
    %v2673 = vpow.pop %v2672
    %v2674 = vmul.f32 %v2557, 1.442695
    %v2675 = vpow.pop %v2674
    %v2676 = vmul.f32 %v2558, 1.442695
    %v2677 = vpow.pop %v2676
    %v2678 = vmul.f32 %v2559, 1.442695
    %v2679 = vpow.pop %v2678
    %v2680 = vmul.f32 %v2560, 1.442695
    %v2681 = vpow.pop %v2680
    %v2682 = vmul.f32 %v2561, 1.442695
    %v2683 = vpow.pop %v2682
    %v2684 = vmul.f32 %v2562, 1.442695
    %v2685 = vpow.pop %v2684
    %v2686 = vmul.f32 %v2563, 1.442695
    %v2687 = vpow.pop %v2686
    %v2688 = vmul.f32 %v2564, 1.442695
    %v2689 = vpow.pop %v2688
    %v2690 = vmul.f32 %v2565, 1.442695
    %v2691 = vpow.pop %v2690
    %v2692 = vmul.f32 %v2566, 1.442695
    %v2693 = vpow.pop %v2692
    %v2694 = vmul.f32 %v2567, 1.442695
    %v2695 = vpow.pop %v2694
    %2696 = vadd.xlane.f32.xlu0 %v2569
    %v2697 = vpop.xlane.xlu0 %2696
    %2698 = vadd.xlane.f32.xlu0 %v2571
    %v2699 = vpop.xlane.xlu0 %2698
    %2700 = vadd.xlane.f32.xlu0 %v2573
    %v2701 = vpop.xlane.xlu0 %2700
    %2702 = vadd.xlane.f32.xlu0 %v2575
    %v2703 = vpop.xlane.xlu0 %2702
    %2704 = vadd.xlane.f32.xlu0 %v2577
    %v2705 = vpop.xlane.xlu0 %2704
    %2706 = vadd.xlane.f32.xlu0 %v2579
    %v2707 = vpop.xlane.xlu0 %2706
    %2708 = vadd.xlane.f32.xlu0 %v2581
    %v2709 = vpop.xlane.xlu0 %2708
    %2710 = vadd.xlane.f32.xlu0 %v2583
    %v2711 = vpop.xlane.xlu0 %2710
    %2712 = vadd.xlane.f32.xlu0 %v2585
    %v2713 = vpop.xlane.xlu0 %2712
    %2714 = vadd.xlane.f32.xlu0 %v2587
    %v2715 = vpop.xlane.xlu0 %2714
    %2716 = vadd.xlane.f32.xlu0 %v2589
    %v2717 = vpop.xlane.xlu0 %2716
    %2718 = vadd.xlane.f32.xlu0 %v2591
    %v2719 = vpop.xlane.xlu0 %2718
    %2720 = vadd.xlane.f32.xlu0 %v2593
    %v2721 = vpop.xlane.xlu0 %2720
    %2722 = vadd.xlane.f32.xlu0 %v2595
    %v2723 = vpop.xlane.xlu0 %2722
    %2724 = vadd.xlane.f32.xlu0 %v2597
    %v2725 = vpop.xlane.xlu0 %2724
    %2726 = vadd.xlane.f32.xlu0 %v2599
    %v2727 = vpop.xlane.xlu0 %2726
    %2728 = vadd.xlane.f32.xlu0 %v2601
    %v2729 = vpop.xlane.xlu0 %2728
    %2730 = vadd.xlane.f32.xlu0 %v2603
    %v2731 = vpop.xlane.xlu0 %2730
    %2732 = vadd.xlane.f32.xlu0 %v2605
    %v2733 = vpop.xlane.xlu0 %2732
    %2734 = vadd.xlane.f32.xlu0 %v2607
    %v2735 = vpop.xlane.xlu0 %2734
    %2736 = vadd.xlane.f32.xlu0 %v2609
    %v2737 = vpop.xlane.xlu0 %2736
    %2738 = vadd.xlane.f32.xlu0 %v2611
    %v2739 = vpop.xlane.xlu0 %2738
    %2740 = vadd.xlane.f32.xlu0 %v2613
    %v2741 = vpop.xlane.xlu0 %2740
    %2742 = vadd.xlane.f32.xlu0 %v2615
    %v2743 = vpop.xlane.xlu0 %2742
    %2744 = vadd.xlane.f32.xlu0 %v2617
    %v2745 = vpop.xlane.xlu0 %2744
    %2746 = vadd.xlane.f32.xlu0 %v2619
    %v2747 = vpop.xlane.xlu0 %2746
    %2748 = vadd.xlane.f32.xlu0 %v2621
    %v2749 = vpop.xlane.xlu0 %2748
    %2750 = vadd.xlane.f32.xlu0 %v2623
    %v2751 = vpop.xlane.xlu0 %2750
    %2752 = vadd.xlane.f32.xlu0 %v2625
    %v2753 = vpop.xlane.xlu0 %2752
    %2754 = vadd.xlane.f32.xlu0 %v2627
    %v2755 = vpop.xlane.xlu0 %2754
    %2756 = vadd.xlane.f32.xlu0 %v2629
    %v2757 = vpop.xlane.xlu0 %2756
    %2758 = vadd.xlane.f32.xlu0 %v2631
    %v2759 = vpop.xlane.xlu0 %2758
    %2760 = vadd.xlane.f32.xlu0 %v2633
    %v2761 = vpop.xlane.xlu0 %2760
    %2762 = vadd.xlane.f32.xlu0 %v2635
    %v2763 = vpop.xlane.xlu0 %2762
    %2764 = vadd.xlane.f32.xlu0 %v2637
    %v2765 = vpop.xlane.xlu0 %2764
    %2766 = vadd.xlane.f32.xlu0 %v2639
    %v2767 = vpop.xlane.xlu0 %2766
    %2768 = vadd.xlane.f32.xlu0 %v2641
    %v2769 = vpop.xlane.xlu0 %2768
    %2770 = vadd.xlane.f32.xlu0 %v2643
    %v2771 = vpop.xlane.xlu0 %2770
    %2772 = vadd.xlane.f32.xlu0 %v2645
    %v2773 = vpop.xlane.xlu0 %2772
    %2774 = vadd.xlane.f32.xlu0 %v2647
    %v2775 = vpop.xlane.xlu0 %2774
    %2776 = vadd.xlane.f32.xlu0 %v2649
    %v2777 = vpop.xlane.xlu0 %2776
    %2778 = vadd.xlane.f32.xlu0 %v2651
    %v2779 = vpop.xlane.xlu0 %2778
    %2780 = vadd.xlane.f32.xlu0 %v2653
    %v2781 = vpop.xlane.xlu0 %2780
    %2782 = vadd.xlane.f32.xlu0 %v2655
    %v2783 = vpop.xlane.xlu0 %2782
    %2784 = vadd.xlane.f32.xlu0 %v2657
    %v2785 = vpop.xlane.xlu0 %2784
    %2786 = vadd.xlane.f32.xlu0 %v2659
    %v2787 = vpop.xlane.xlu0 %2786
    %2788 = vadd.xlane.f32.xlu0 %v2661
    %v2789 = vpop.xlane.xlu0 %2788
    %2790 = vadd.xlane.f32.xlu0 %v2663
    %v2791 = vpop.xlane.xlu0 %2790
    %2792 = vadd.xlane.f32.xlu0 %v2665
    %v2793 = vpop.xlane.xlu0 %2792
    %2794 = vadd.xlane.f32.xlu0 %v2667
    %v2795 = vpop.xlane.xlu0 %2794
    %2796 = vadd.xlane.f32.xlu0 %v2669
    %v2797 = vpop.xlane.xlu0 %2796
    %2798 = vadd.xlane.f32.xlu0 %v2671
    %v2799 = vpop.xlane.xlu0 %2798
    %2800 = vadd.xlane.f32.xlu0 %v2673
    %v2801 = vpop.xlane.xlu0 %2800
    %2802 = vadd.xlane.f32.xlu0 %v2675
    %v2803 = vpop.xlane.xlu0 %2802
    %2804 = vadd.xlane.f32.xlu0 %v2677
    %v2805 = vpop.xlane.xlu0 %2804
    %2806 = vadd.xlane.f32.xlu0 %v2679
    %v2807 = vpop.xlane.xlu0 %2806
    %2808 = vadd.xlane.f32.xlu0 %v2681
    %v2809 = vpop.xlane.xlu0 %2808
    %2810 = vadd.xlane.f32.xlu0 %v2683
    %v2811 = vpop.xlane.xlu0 %2810
    %2812 = vadd.xlane.f32.xlu0 %v2685
    %v2813 = vpop.xlane.xlu0 %2812
    %2814 = vadd.xlane.f32.xlu0 %v2687
    %v2815 = vpop.xlane.xlu0 %2814
    %2816 = vadd.xlane.f32.xlu0 %v2689
    %v2817 = vpop.xlane.xlu0 %2816
    %2818 = vadd.xlane.f32.xlu0 %v2691
    %v2819 = vpop.xlane.xlu0 %2818
    %2820 = vadd.xlane.f32.xlu0 %v2693
    %v2821 = vpop.xlane.xlu0 %2820
    %2822 = vadd.xlane.f32.xlu0 %v2695
    %v2823 = vpop.xlane.xlu0 %2822
    %v2824 = vrcp.pop %v2697
    %v2825 = vrcp.pop %v2699
    %v2826 = vrcp.pop %v2701
    %v2827 = vrcp.pop %v2703
    %v2828 = vrcp.pop %v2705
    %v2829 = vrcp.pop %v2707
    %v2830 = vrcp.pop %v2709
    %v2831 = vrcp.pop %v2711
    %v2832 = vrcp.pop %v2713
    %v2833 = vrcp.pop %v2715
    %v2834 = vrcp.pop %v2717
    %v2835 = vrcp.pop %v2719
    %v2836 = vrcp.pop %v2721
    %v2837 = vrcp.pop %v2723
    %v2838 = vrcp.pop %v2725
    %v2839 = vrcp.pop %v2727
    %v2840 = vrcp.pop %v2729
    %v2841 = vrcp.pop %v2731
    %v2842 = vrcp.pop %v2733
    %v2843 = vrcp.pop %v2735
    %v2844 = vrcp.pop %v2737
    %v2845 = vrcp.pop %v2739
    %v2846 = vrcp.pop %v2741
    %v2847 = vrcp.pop %v2743
    %v2848 = vrcp.pop %v2745
    %v2849 = vrcp.pop %v2747
    %v2850 = vrcp.pop %v2749
    %v2851 = vrcp.pop %v2751
    %v2852 = vrcp.pop %v2753
    %v2853 = vrcp.pop %v2755
    %v2854 = vrcp.pop %v2757
    %v2855 = vrcp.pop %v2759
    %v2856 = vrcp.pop %v2761
    %v2857 = vrcp.pop %v2763
    %v2858 = vrcp.pop %v2765
    %v2859 = vrcp.pop %v2767
    %v2860 = vrcp.pop %v2769
    %v2861 = vrcp.pop %v2771
    %v2862 = vrcp.pop %v2773
    %v2863 = vrcp.pop %v2775
    %v2864 = vrcp.pop %v2777
    %v2865 = vrcp.pop %v2779
    %v2866 = vrcp.pop %v2781
    %v2867 = vrcp.pop %v2783
    %v2868 = vrcp.pop %v2785
    %v2869 = vrcp.pop %v2787
    %v2870 = vrcp.pop %v2789
    %v2871 = vrcp.pop %v2791
    %v2872 = vrcp.pop %v2793
    %v2873 = vrcp.pop %v2795
    %v2874 = vrcp.pop %v2797
    %v2875 = vrcp.pop %v2799
    %v2876 = vrcp.pop %v2801
    %v2877 = vrcp.pop %v2803
    %v2878 = vrcp.pop %v2805
    %v2879 = vrcp.pop %v2807
    %v2880 = vrcp.pop %v2809
    %v2881 = vrcp.pop %v2811
    %v2882 = vrcp.pop %v2813
    %v2883 = vrcp.pop %v2815
    %v2884 = vrcp.pop %v2817
    %v2885 = vrcp.pop %v2819
    %v2886 = vrcp.pop %v2821
    %v2887 = vrcp.pop %v2823
    %v2888 = vmul.f32 %v2569, %v2824
    %v2889 = vmul.f32 %v2571, %v2825
    %v2890 = vmul.f32 %v2573, %v2826
    %v2891 = vmul.f32 %v2575, %v2827
    %v2892 = vmul.f32 %v2577, %v2828
    %v2893 = vmul.f32 %v2579, %v2829
    %v2894 = vmul.f32 %v2581, %v2830
    %v2895 = vmul.f32 %v2583, %v2831
    %v2896 = vmul.f32 %v2585, %v2832
    %v2897 = vmul.f32 %v2587, %v2833
    %v2898 = vmul.f32 %v2589, %v2834
    %v2899 = vmul.f32 %v2591, %v2835
    %v2900 = vmul.f32 %v2593, %v2836
    %v2901 = vmul.f32 %v2595, %v2837
    %v2902 = vmul.f32 %v2597, %v2838
    %v2903 = vmul.f32 %v2599, %v2839
    %v2904 = vmul.f32 %v2601, %v2840
    %v2905 = vmul.f32 %v2603, %v2841
    %v2906 = vmul.f32 %v2605, %v2842
    %v2907 = vmul.f32 %v2607, %v2843
    %v2908 = vmul.f32 %v2609, %v2844
    %v2909 = vmul.f32 %v2611, %v2845
    %v2910 = vmul.f32 %v2613, %v2846
    %v2911 = vmul.f32 %v2615, %v2847
    %v2912 = vmul.f32 %v2617, %v2848
    %v2913 = vmul.f32 %v2619, %v2849
    %v2914 = vmul.f32 %v2621, %v2850
    %v2915 = vmul.f32 %v2623, %v2851
    %v2916 = vmul.f32 %v2625, %v2852
    %v2917 = vmul.f32 %v2627, %v2853
    %v2918 = vmul.f32 %v2629, %v2854
    %v2919 = vmul.f32 %v2631, %v2855
    %v2920 = vmul.f32 %v2633, %v2856
    %v2921 = vmul.f32 %v2635, %v2857
    %v2922 = vmul.f32 %v2637, %v2858
    %v2923 = vmul.f32 %v2639, %v2859
    %v2924 = vmul.f32 %v2641, %v2860
    %v2925 = vmul.f32 %v2643, %v2861
    %v2926 = vmul.f32 %v2645, %v2862
    %v2927 = vmul.f32 %v2647, %v2863
    %v2928 = vmul.f32 %v2649, %v2864
    %v2929 = vmul.f32 %v2651, %v2865
    %v2930 = vmul.f32 %v2653, %v2866
    %v2931 = vmul.f32 %v2655, %v2867
    %v2932 = vmul.f32 %v2657, %v2868
    %v2933 = vmul.f32 %v2659, %v2869
    %v2934 = vmul.f32 %v2661, %v2870
    %v2935 = vmul.f32 %v2663, %v2871
    %v2936 = vmul.f32 %v2665, %v2872
    %v2937 = vmul.f32 %v2667, %v2873
    %v2938 = vmul.f32 %v2669, %v2874
    %v2939 = vmul.f32 %v2671, %v2875
    %v2940 = vmul.f32 %v2673, %v2876
    %v2941 = vmul.f32 %v2675, %v2877
    %v2942 = vmul.f32 %v2677, %v2878
    %v2943 = vmul.f32 %v2679, %v2879
    %v2944 = vmul.f32 %v2681, %v2880
    %v2945 = vmul.f32 %v2683, %v2881
    %v2946 = vmul.f32 %v2685, %v2882
    %v2947 = vmul.f32 %v2687, %v2883
    %v2948 = vmul.f32 %v2689, %v2884
    %v2949 = vmul.f32 %v2691, %v2885
    %v2950 = vmul.f32 %v2693, %v2886
    %v2951 = vmul.f32 %v2695, %v2887
    %2952 = vst [vmem:[#allocation2] sm:$0xff] %v2888
    %2953 = vst [vmem:[#allocation2 + $0x8] sm:$0xff] %v2889
    %2954 = vst [vmem:[#allocation2 + $0x10] sm:$0xff] %v2890
    %2955 = vst [vmem:[#allocation2 + $0x18] sm:$0xff] %v2891
    %2956 = vst [vmem:[#allocation2 + $0x20] sm:$0xff] %v2892
    %2957 = vst [vmem:[#allocation2 + $0x28] sm:$0xff] %v2893
    %2958 = vst [vmem:[#allocation2 + $0x30] sm:$0xff] %v2894
    %2959 = vst [vmem:[#allocation2 + $0x38] sm:$0xff] %v2895
    %2960 = vst [vmem:[#allocation2 + $0x40] sm:$0xff] %v2896
    %2961 = vst [vmem:[#allocation2 + $0x48] sm:$0xff] %v2897
    %2962 = vst [vmem:[#allocation2 + $0x50] sm:$0xff] %v2898
    %2963 = vst [vmem:[#allocation2 + $0x58] sm:$0xff] %v2899
    %2964 = vst [vmem:[#allocation2 + $0x60] sm:$0xff] %v2900
    %2965 = vst [vmem:[#allocation2 + $0x68] sm:$0xff] %v2901
    %2966 = vst [vmem:[#allocation2 + $0x70] sm:$0xff] %v2902
    %2967 = vst [vmem:[#allocation2 + $0x78] sm:$0xff] %v2903
    %2968 = vst [vmem:[#allocation2 + $0x80] sm:$0xff] %v2904
    %2969 = vst [vmem:[#allocation2 + $0x88] sm:$0xff] %v2905
    %2970 = vst [vmem:[#allocation2 + $0x90] sm:$0xff] %v2906
    %2971 = vst [vmem:[#allocation2 + $0x98] sm:$0xff] %v2907
    %2972 = vst [vmem:[#allocation2 + $0xa0] sm:$0xff] %v2908
    %2973 = vst [vmem:[#allocation2 + $0xa8] sm:$0xff] %v2909
    %2974 = vst [vmem:[#allocation2 + $0xb0] sm:$0xff] %v2910
    %2975 = vst [vmem:[#allocation2 + $0xb8] sm:$0xff] %v2911
    %2976 = vst [vmem:[#allocation2 + $0xc0] sm:$0xff] %v2912
    %2977 = vst [vmem:[#allocation2 + $0xc8] sm:$0xff] %v2913
    %2978 = vst [vmem:[#allocation2 + $0xd0] sm:$0xff] %v2914
    %2979 = vst [vmem:[#allocation2 + $0xd8] sm:$0xff] %v2915
    %2980 = vst [vmem:[#allocation2 + $0xe0] sm:$0xff] %v2916
    %2981 = vst [vmem:[#allocation2 + $0xe8] sm:$0xff] %v2917
    %2982 = vst [vmem:[#allocation2 + $0xf0] sm:$0xff] %v2918
    %2983 = vst [vmem:[#allocation2 + $0xf8] sm:$0xff] %v2919
    %2984 = vst [vmem:[#allocation2 + $0x100] sm:$0xff] %v2920
    %2985 = vst [vmem:[#allocation2 + $0x108] sm:$0xff] %v2921
    %2986 = vst [vmem:[#allocation2 + $0x110] sm:$0xff] %v2922
    %2987 = vst [vmem:[#allocation2 + $0x118] sm:$0xff] %v2923
    %2988 = vst [vmem:[#allocation2 + $0x120] sm:$0xff] %v2924
    %2989 = vst [vmem:[#allocation2 + $0x128] sm:$0xff] %v2925
    %2990 = vst [vmem:[#allocation2 + $0x130] sm:$0xff] %v2926
    %2991 = vst [vmem:[#allocation2 + $0x138] sm:$0xff] %v2927
    %2992 = vst [vmem:[#allocation2 + $0x140] sm:$0xff] %v2928
    %2993 = vst [vmem:[#allocation2 + $0x148] sm:$0xff] %v2929
    %2994 = vst [vmem:[#allocation2 + $0x150] sm:$0xff] %v2930
    %2995 = vst [vmem:[#allocation2 + $0x158] sm:$0xff] %v2931
    %2996 = vst [vmem:[#allocation2 + $0x160] sm:$0xff] %v2932
    %2997 = vst [vmem:[#allocation2 + $0x168] sm:$0xff] %v2933
    %2998 = vst [vmem:[#allocation2 + $0x170] sm:$0xff] %v2934
    %2999 = vst [vmem:[#allocation2 + $0x178] sm:$0xff] %v2935
    %3000 = vst [vmem:[#allocation2 + $0x180] sm:$0xff] %v2936
    %3001 = vst [vmem:[#allocation2 + $0x188] sm:$0xff] %v2937
    %3002 = vst [vmem:[#allocation2 + $0x190] sm:$0xff] %v2938
    %3003 = vst [vmem:[#allocation2 + $0x198] sm:$0xff] %v2939
    %3004 = vst [vmem:[#allocation2 + $0x1a0] sm:$0xff] %v2940
    %3005 = vst [vmem:[#allocation2 + $0x1a8] sm:$0xff] %v2941
    %3006 = vst [vmem:[#allocation2 + $0x1b0] sm:$0xff] %v2942
    %3007 = vst [vmem:[#allocation2 + $0x1b8] sm:$0xff] %v2943
    %3008 = vst [vmem:[#allocation2 + $0x1c0] sm:$0xff] %v2944
    %3009 = vst [vmem:[#allocation2 + $0x1c8] sm:$0xff] %v2945
    %3010 = vst [vmem:[#allocation2 + $0x1d0] sm:$0xff] %v2946
    %3011 = vst [vmem:[#allocation2 + $0x1d8] sm:$0xff] %v2947
    %3012 = vst [vmem:[#allocation2 + $0x1e0] sm:$0xff] %v2948
    %3013 = vst [vmem:[#allocation2 + $0x1e8] sm:$0xff] %v2949
    %3014 = vst [vmem:[#allocation2 + $0x1f0] sm:$0xff] %v2950
    %3015 = vst [vmem:[#allocation2 + $0x1f8] sm:$0xff] %v2951
    // Predicated region
    $region38: #{tpu_custom_call.1} parent=1 // pred_check
      _
    $region39: #{tpu_custom_call.1} parent=1 // pred_check_branch
      %3017 = sbr.rel (0) target = $region41
    $region40: #{tpu_custom_call.1} parent=1 // pred_region
      %s3019 = ssub.s32 8192, 8192
      %3020 = vsyncadd [#allocation3], %s3019
      %s3021 = sshll.u32 [#allocation2], 4
      %s3022 = int_to_ptr.vmem [resolvable:$true] %s3021
      %3027 = dma.vmem_to_hbm [thread:$0]  %s3022, 8192, %s9, [#allocation3], 128, 128, 8
    $region41: #{tpu_custom_call.1} parent=1 // pred_fallthru
      _
    // Predicated region
    $region42: #{tpu_custom_call.1} parent=1 // pred_check
      _
    $region43: #{tpu_custom_call.1} parent=1 // pred_check_branch
      %3029 = sbr.rel (0) target = $region45
    $region44: #{tpu_custom_call.1} parent=1 // pred_region
      %3030 = dma.done [#allocation3], 8192
    $region45: #{tpu_custom_call.1} parent=1 // pred_fallthru
      _
    %3031 = vsyncpa [#allocation3], 1

</llo_original>
